<compile_context>
chip_gen: v5e
topology: v5e:2x2
jax: 0.10.0
libtpu: 0.0.40
codegen_flags: <defaults>
</compile_context>

<pallas_src>
import functools

import jax
import jax.numpy as jnp
from jax import lax
from jax.experimental import pallas as pl
from jax.experimental.pallas import tpu as pltpu

_NEG_BIG = -1e30  # finite "masked" sentinel (avoids -inf -> NaN on empty rows)


def _leaky_relu(v, slope=0.2):
    return jnp.where(v >= 0, v, slope * v)


def _round_up(n, m):
    return (n + m - 1) // m * m


def _choose_query_tile(n_tokens, max_q):
    """Query-row tile (multiple of 16 sublanes -> safe for bf16 operands)."""
    if n_tokens <= 128:
        tq = _round_up(n_tokens, 16)
    elif n_tokens <= 2 * max_q:
        # split into >= 2 tiles so both v7x TensorCores get a grid step
        tq = _round_up((n_tokens + 1) // 2, 16)
    else:
        tq = max_q
    n_pad = _round_up(n_tokens, tq)
    return tq, n_pad


def _pad2d(a, shape, dtype):
    """Cast + zero-pad to `shape`; skips the copy when already that shape."""
    a = a.astype(dtype)
    if a.shape == tuple(shape):
        return a
    return jnp.zeros(shape, dtype).at[:a.shape[0], :a.shape[1]].set(a)


def _vmem_limit_bytes(tq, tk, hidden, cd):
    f32b = 4
    cdb = jnp.dtype(cd).itemsize
    per_step = (tq * hidden * f32b            # residual rows
                + tq * hidden * cdb           # projected query rows
                + tk * hidden * cdb           # projected keys / values
                + tq * tk * 2                 # bf16 mask bias
                + 2 * hidden * hidden * cdb   # wq, wfin
                + 2 * hidden * f32b           # bq, bfin
                + tq * hidden * f32b)         # output block
    scratch = tq * hidden * (cdb + 3 * f32b)  # q + running max/denom + acc
    est = 2 * per_step + scratch + (4 << 20)  # double-buffered + slack
    return int(min(max(est, 16 << 20), 64 << 20))


def _graphnn_kernel(x_res_ref, xq_ref, kv_ref, bias_ref,
                    wq_ref, bq_ref, wfin_ref, bfin_ref,
                    out_ref,
                    q_scr, m_scr, l_scr, acc_scr,
                    *, n_heads, head_dim, compute_dtype):
    f32 = jnp.float32
    cd = compute_dtype
    k_idx = pl.program_id(1)
    n_k = pl.num_programs(1)

    @pl.when(k_idx == 0)
    def _init():
        # qfc on the (already fc-projected) current-utterance rows; the /10
        # score scale is folded into wq / bq by the wrapper.
        q = _leaky_relu(jnp.dot(xq_ref[...], wq_ref[...],
                                preferred_element_type=f32) + bq_ref[...])
        q_scr[...] = q.astype(cd)
        m_scr[...] = jnp.full_like(m_scr, _NEG_BIG)
        l_scr[...] = jnp.zeros_like(l_scr)
        acc_scr[...] = jnp.zeros_like(acc_scr)

    kv = kv_ref[...]                                   # (TK, H)  keys == values
    bias = bias_ref[...].astype(f32)                   # (TQ, TK) additive mask
    q = q_scr[...]                                     # (TQ, H)
    dn = (((1,), (1,)), ((), ()))   # contract last dims: (TQ,hd)x(TK,hd)->(TQ,TK)

    for h in range(n_heads):        # static python loop, 3 heads of 128 lanes
        lo = h * head_dim
        qh = q[:, lo:lo + head_dim]                    # (TQ, hd)
        kh = kv[:, lo:lo + head_dim]                   # (TK, hd)
        s = lax.dot_general(qh, kh, dimension_numbers=dn,
                            preferred_element_type=f32) + bias       # (TQ, TK)
        # Online softmax. Running stats are kept broadcast across each head's
        # 128 lanes so every scratch store is a lane-aligned column slice.
        m_prev = m_scr[:, lo:lo + head_dim]
        m_new = jnp.maximum(m_prev, jnp.max(s, axis=-1, keepdims=True))
        alpha = jnp.exp(m_prev - m_new)
        p = jnp.exp(s - m_new[:, :1])                                  # (TQ, TK)
        l_scr[:, lo:lo + head_dim] = (alpha * l_scr[:, lo:lo + head_dim]
                                      + jnp.sum(p, axis=-1, keepdims=True))
        acc_scr[:, lo:lo + head_dim] = (
            alpha * acc_scr[:, lo:lo + head_dim]
            + jnp.dot(p.astype(cd), kh, preferred_element_type=f32))
        m_scr[:, lo:lo + head_dim] = m_new

    @pl.when(k_idx == n_k - 1)
    def _finalize():
        x_res = x_res_ref[...]                         # (TQ, H) f32 residual
        for h in range(n_heads):
            lo = h * head_dim
            # exact softmax normalization + residual fold-in
            acc_scr[:, lo:lo + head_dim] = (
                x_res[:, lo:lo + head_dim]
                + acc_scr[:, lo:lo + head_dim] / l_scr[:, lo:lo + head_dim])
        outputs = acc_scr[...]                         # (TQ, H) == x + attn_out
        final = _leaky_relu(jnp.dot(outputs.astype(cd), wfin_ref[...],
                                    preferred_element_type=f32) + bfin_ref[...])
        out_ref[...] = x_res + final


def graphnn_forward(x, adj_matrix, params, previous_x=None, *,
                    compute_dtype=jnp.float32, max_query_tile=256,
                    key_tile=512, interpret=False):
    """Pallas implementation of GraphNN.forward (eval mode)."""
    assert key_tile % 128 == 0
    wfc, bfc, wq, bq, wfin, bfin = params
    n_tokens, hidden = x.shape
    assert hidden % 3 == 0
    head_dim = hidden // 3

    f32 = jnp.float32
    cd = compute_dtype
    hp = lax.Precision.HIGHEST

    x = x.astype(f32)
    if previous_x is not None:
        x_all = jnp.concatenate([previous_x.astype(f32), x], axis=0)
        n_prev = previous_x.shape[0]
    else:
        x_all, n_prev = x, 0
    m_total = x_all.shape[0]
    assert adj_matrix.shape == (m_total, m_total)

    # ---- hoisted: fc projection over the whole context, computed ONCE ----
    x_new = _leaky_relu(jnp.dot(x_all, wfc.astype(f32), precision=hp)
                        + bfc.astype(f32).reshape(1, hidden))          # (M, H)
    x_new_q = x_new[n_prev:n_prev + n_tokens]          # current-utterance rows

    # ---- tiling / padding ----
    tq, n_pad = _choose_query_tile(n_tokens, max_query_tile)
    n_q_tiles = n_pad // tq
    if m_total <= key_tile:
        tk = _round_up(m_total, 128)
        m_pad = tk
    else:
        tk = key_tile
        m_pad = _round_up(m_total, tk)
    n_k_tiles = m_pad // tk

    x_res_p = _pad2d(x, (n_pad, hidden), f32)          # residual rows (f32)
    xq_p = _pad2d(x_new_q, (n_pad, hidden), cd)        # projected query rows
    kv_p = _pad2d(x_new, (m_pad, hidden), cd)          # projected keys/values

    # additive mask bias, precomputed once, shipped as bf16 (half the DMA of
    # an f32 adjacency slab); padded key columns / query rows are masked.
    adj_q = adj_matrix[n_prev:n_prev + n_tokens, :]
    bias_core = jnp.where(adj_q == 0, _NEG_BIG, 0.0).astype(jnp.bfloat16)
    bias_p = jnp.full((n_pad, m_pad), _NEG_BIG, jnp.bfloat16)
    bias_p = bias_p.at[:n_tokens, :m_total].set(bias_core)

    # fold the /10 score scale into qfc (leaky_relu(0.1 z) == 0.1 leaky_relu(z))
    wq_s = (wq.astype(f32) * 0.1).astype(cd)
    bq_s = (bq.astype(f32) * 0.1).reshape(1, hidden)
    wfin_c = wfin.astype(cd)
    bfin_r = bfin.astype(f32).reshape(1, hidden)

    kernel = functools.partial(_graphnn_kernel, n_heads=3, head_dim=head_dim,
                               compute_dtype=cd)

    row = lambda i, k: (i, 0)
    keyb = lambda i, k: (k, 0)
    tile = lambda i, k: (i, k)
    full = lambda i, k: (0, 0)

    out = pl.pallas_call(
        kernel,
        out_shape=jax.ShapeDtypeStruct((n_pad, hidden), f32),
        grid_spec=pltpu.PrefetchScalarGridSpec(
            num_scalar_prefetch=0,
            grid=(n_q_tiles, n_k_tiles),
            in_specs=[
                pl.BlockSpec((tq, hidden), row),        # x (residual rows, f32)
                pl.BlockSpec((tq, hidden), row),        # fc-projected query rows
                pl.BlockSpec((tk, hidden), keyb),       # fc-projected keys/values
                pl.BlockSpec((tq, tk), tile),           # additive mask bias (bf16)
                pl.BlockSpec((hidden, hidden), full),   # wq (x0.1)
                pl.BlockSpec((1, hidden), full),        # bq (x0.1)
                pl.BlockSpec((hidden, hidden), full),   # wfin
                pl.BlockSpec((1, hidden), full),        # bfin
            ],
            out_specs=pl.BlockSpec((tq, hidden), row),
            scratch_shapes=[
                pltpu.VMEM((tq, hidden), cd),    # q (query projection)
                pltpu.VMEM((tq, hidden), f32),   # running max (per head, lane-bcast)
                pltpu.VMEM((tq, hidden), f32),   # running denominator
                pltpu.VMEM((tq, hidden), f32),   # attention accumulator / outputs
            ],
        ),
        compiler_params=pltpu.CompilerParams(
            dimension_semantics=("parallel", "arbitrary"),
            vmem_limit_bytes=_vmem_limit_bytes(tq, tk, hidden, cd)),
        interpret=interpret,
    )(x_res_p, xq_p, kv_p, bias_p, wq_s, bq_s, wfin_c, bfin_r)
    return out[:n_tokens]


def graphnn_ref(x, adj_matrix, params, previous_x=None):
    """Pure-JAX reference (mirrors the PyTorch forward, eval mode)."""
    wfc, bfc, wq, bq, wfin, bfin = params
    hp = lax.Precision.HIGHEST
    x_all = x if previous_x is None else jnp.concatenate([previous_x, x], axis=0)
    n_prev = 0 if previous_x is None else previous_x.shape[0]
    n_tokens = x.shape[0]

    x_new = _leaky_relu(jnp.dot(x_all, wfc, precision=hp) + bfc.reshape(1, -1))
    q = _leaky_relu(jnp.dot(x_new, wq, precision=hp) + bq.reshape(1, -1))
    x_ = jnp.stack(jnp.split(x_new, 3, axis=-1), axis=0)   # (3, M, Hd)
    q_ = jnp.stack(jnp.split(q, 3, axis=-1), axis=0)
    scores = jnp.einsum('hmd,hnd->hmn', q_, x_, precision=hp) / 10.0
    scores = jnp.where(adj_matrix == 0, -jnp.inf, scores)
    attn = jax.nn.softmax(scores, axis=-1)
    out = jnp.einsum('hmn,hnd->hmd', attn, x_, precision=hp)    # (3, M, Hd)
    out = jnp.concatenate([out[h] for h in range(3)], axis=-1)  # (M, H)
    out = out[n_prev:n_prev + n_tokens]
    outputs = x + out
    return x + _leaky_relu(jnp.dot(outputs, wfin, precision=hp)
                           + bfin.reshape(1, -1))


def init_params(key, hidden):
    """Xavier-uniform weights (stored as (in, out)), zero biases."""
    limit = (6.0 / (hidden + hidden)) ** 0.5
    ks = jax.random.split(key, 3)
    wfc = jax.random.uniform(ks[0], (hidden, hidden), jnp.float32, -limit, limit)
    wq = jax.random.uniform(ks[1], (hidden, hidden), jnp.float32, -limit, limit)
    wfin = jax.random.uniform(ks[2], (hidden, hidden), jnp.float32, -limit, limit)
    zeros = jnp.zeros((1, hidden), jnp.float32)
    return (wfc, zeros, wq, zeros, wfin, zeros)


if __name__ == "__main__":
    key = jax.random.PRNGKey(0)
    hidden = 384          # encoder_state_size; head dim = 128 (lane-aligned)

    k_x, k_adj, k_w, k_px, k_padj = jax.random.split(key, 5)
    params = init_params(k_w, hidden)

    # --- case 1: single tiny utterance (original unit-test regime) ---
    n1 = 8
    x1 = jax.random.normal(k_x, (n1, hidden), jnp.float32)
    adj1 = (jax.random.uniform(k_adj, (n1, n1)) > 0.5).astype(jnp.float32)
    adj1 = jnp.maximum(adj1, jnp.eye(n1, dtype=jnp.float32))
    out1 = jax.block_until_ready(graphnn_forward(x1, adj1, params))
    ref1 = graphnn_ref(x1, adj1, params)
    assert out1.shape == (n1, hidden)
    err1 = float(jnp.max(jnp.abs(out1 - ref1)))
    assert err1 < 5e-2, f"case1 mismatch (max abs err {err1})"

    # --- case 2: previous context; exercises padding + 2 query tiles ---
    n2, p2 = 200, 200
    x2 = jax.random.normal(k_x, (n2, hidden), jnp.float32)
    prev2 = jax.random.normal(k_px, (p2, hidden), jnp.float32)
    m2 = n2 + p2
    adj2 = (jax.random.uniform(k_padj, (m2, m2)) > 0.7).astype(jnp.float32)
    adj2 = jnp.maximum(adj2, jnp.eye(m2, dtype=jnp.float32))
    ref2 = graphnn_ref(x2, adj2, params, previous_x=prev2)

    out2 = jax.block_until_ready(
        graphnn_forward(x2, adj2, params, previous_x=prev2))
    assert out2.shape == (n2, hidden)
    err2 = float(jnp.max(jnp.abs(out2 - ref2)))
    assert err2 < 5e-2, f"case2 mismatch (max abs err {err2})"

    # --- case 2b: force small key tiles -> multi-step online softmax path ---
    out2b = jax.block_until_ready(
        graphnn_forward(x2, adj2, params, previous_x=prev2, key_tile=128))
    err2b = float(jnp.max(jnp.abs(out2b - ref2)))
    assert err2b < 5e-2, f"case2b mismatch (max abs err {err2b})"

    # --- case 3: bf16 MXU operands (v6e/v7x fast path), f32 accumulation ---
    out3 = jax.block_until_ready(
        graphnn_forward(x2, adj2, params, previous_x=prev2,
                        compute_dtype=jnp.bfloat16))
    rel3 = float(jnp.linalg.norm(out3 - ref2) / jnp.linalg.norm(ref2))
    assert rel3 < 5e-2, f"case3 (bf16) mismatch (rel err {rel3})"

    print("KERNEL_OK")
</pallas_src>

<mosaic_0001>
module attributes {stable_mosaic.version = 11 : i64} {
  func.func @_graphnn_kernel(%arg0: i32, %arg1: i32, %arg2: memref<16x384xf32, #tpu.memory_space<vmem>>, %arg3: memref<16x384xf32, #tpu.memory_space<vmem>>, %arg4: memref<128x384xf32, #tpu.memory_space<vmem>>, %arg5: memref<16x128xbf16, #tpu.memory_space<vmem>>, %arg6: memref<384x384xf32, #tpu.memory_space<vmem>>, %arg7: memref<1x384xf32, #tpu.memory_space<vmem>>, %arg8: memref<384x384xf32, #tpu.memory_space<vmem>>, %arg9: memref<1x384xf32, #tpu.memory_space<vmem>>, %arg10: memref<16x384xf32, #tpu.memory_space<vmem>>, %arg11: memref<16x384xf32, #tpu.memory_space<vmem>>, %arg12: memref<16x384xf32, #tpu.memory_space<vmem>>, %arg13: memref<16x384xf32, #tpu.memory_space<vmem>>, %arg14: memref<16x384xf32, #tpu.memory_space<vmem>>) attributes {dimension_semantics = [#tpu.dimension_semantics<parallel>, #tpu.dimension_semantics<arbitrary>], iteration_bounds = array<i64: 1, 1>, scalar_prefetch = 0 : i64, scratch_operands = 4 : i64, tpu.core_type = #tpu.core_type<tc>, window_params = [{transform_indices = @transform_0, window_bounds = array<i64: 16, 384>}, {transform_indices = @transform_1, window_bounds = array<i64: 16, 384>}, {transform_indices = @transform_2, window_bounds = array<i64: 128, 384>}, {transform_indices = @transform_3, window_bounds = array<i64: 16, 128>}, {pipeline_mode = #tpu.pipeline_mode<synchronous>, transform_indices = @transform_4, window_bounds = array<i64: 384, 384>}, {pipeline_mode = #tpu.pipeline_mode<synchronous>, transform_indices = @transform_5, window_bounds = array<i64: 1, 384>}, {pipeline_mode = #tpu.pipeline_mode<synchronous>, transform_indices = @transform_6, window_bounds = array<i64: 384, 384>}, {pipeline_mode = #tpu.pipeline_mode<synchronous>, transform_indices = @transform_7, window_bounds = array<i64: 1, 384>}, {transform_indices = @transform_8, window_bounds = array<i64: 16, 384>}]} {
    %c0_i32 = arith.constant 0 : i32
    %0 = arith.cmpi eq, %arg1, %c0_i32 : i32
    %1 = arith.extui %0 : i1 to i32
    %c0_i32_0 = arith.constant 0 : i32
    %2 = arith.cmpi ne, %1, %c0_i32_0 : i32
    scf.if %2 {
      %c0_53 = arith.constant 0 : index
      %c0_54 = arith.constant 0 : index
      %94 = vector.load %arg3[%c0_53, %c0_54] : memref<16x384xf32, #tpu.memory_space<vmem>>, vector<16x384xf32>
      %c0_55 = arith.constant 0 : index
      %c0_56 = arith.constant 0 : index
      %95 = vector.load %arg6[%c0_55, %c0_56] : memref<384x384xf32, #tpu.memory_space<vmem>>, vector<384x384xf32>
      %cst_57 = arith.constant dense<0.000000e+00> : vector<16x384xf32>
      %96 = tpu.matmul %94, %95, %cst_57 {dimension_numbers = #tpu.dot_dimension_numbers<[1], [0], [0], [1], [0, 0, 1, 1], [], []>} : vector<16x384xf32>, vector<384x384xf32>, vector<16x384xf32> -> vector<16x384xf32>
      %c0_58 = arith.constant 0 : index
      %c0_59 = arith.constant 0 : index
      %97 = vector.load %arg7[%c0_58, %c0_59] : memref<1x384xf32, #tpu.memory_space<vmem>>, vector<1x384xf32>
      %98 = vector.broadcast %97 : vector<1x384xf32> to vector<16x384xf32>
      %99 = arith.addf %96, %98 : vector<16x384xf32>
      %cst_60 = arith.constant 0.000000e+00 : f32
      %100 = vector.broadcast %cst_60 : f32 to vector<16x384xf32>
      %101 = arith.cmpf oge, %99, %100 : vector<16x384xf32>
      %cst_61 = arith.constant 2.000000e-01 : f32
      %102 = vector.broadcast %cst_61 : f32 to vector<16x384xf32>
      %103 = arith.mulf %102, %99 : vector<16x384xf32>
      %104 = arith.select %101, %99, %103 : vector<16x384xi1>, vector<16x384xf32>
      %c0_62 = arith.constant 0 : index
      %c0_63 = arith.constant 0 : index
      %105 = vector.load %arg11[%c0_62, %c0_63] : memref<16x384xf32, #tpu.memory_space<vmem>>, vector<16x384xf32>
      tpu.vector_store %arg11[%c0_62, %c0_63], %104 {strides = array<i32>} : memref<16x384xf32, #tpu.memory_space<vmem>>, vector<16x384xf32>,
      %cst_64 = arith.constant -1.000000e+30 : f32
      %106 = vector.broadcast %cst_64 : f32 to vector<16x384xf32>
      %c0_65 = arith.constant 0 : index
      %c0_66 = arith.constant 0 : index
      %107 = vector.load %arg12[%c0_65, %c0_66] : memref<16x384xf32, #tpu.memory_space<vmem>>, vector<16x384xf32>
      tpu.vector_store %arg12[%c0_65, %c0_66], %106 {strides = array<i32>} : memref<16x384xf32, #tpu.memory_space<vmem>>, vector<16x384xf32>,
      %cst_67 = arith.constant 0.000000e+00 : f32
      %108 = vector.broadcast %cst_67 : f32 to vector<16x384xf32>
      %c0_68 = arith.constant 0 : index
      %c0_69 = arith.constant 0 : index
      %109 = vector.load %arg13[%c0_68, %c0_69] : memref<16x384xf32, #tpu.memory_space<vmem>>, vector<16x384xf32>
      tpu.vector_store %arg13[%c0_68, %c0_69], %108 {strides = array<i32>} : memref<16x384xf32, #tpu.memory_space<vmem>>, vector<16x384xf32>,
      %cst_70 = arith.constant 0.000000e+00 : f32
      %110 = vector.broadcast %cst_70 : f32 to vector<16x384xf32>
      %c0_71 = arith.constant 0 : index
      %c0_72 = arith.constant 0 : index
      %111 = vector.load %arg14[%c0_71, %c0_72] : memref<16x384xf32, #tpu.memory_space<vmem>>, vector<16x384xf32>
      tpu.vector_store %arg14[%c0_71, %c0_72], %110 {strides = array<i32>} : memref<16x384xf32, #tpu.memory_space<vmem>>, vector<16x384xf32>,
    } else {
    }
    %c0 = arith.constant 0 : index
    %c0_1 = arith.constant 0 : index
    %3 = vector.load %arg4[%c0, %c0_1] : memref<128x384xf32, #tpu.memory_space<vmem>>, vector<128x384xf32>
    %c0_2 = arith.constant 0 : index
    %c0_3 = arith.constant 0 : index
    %4 = vector.load %arg5[%c0_2, %c0_3] : memref<16x128xbf16, #tpu.memory_space<vmem>>, vector<16x128xbf16>
    %5 = arith.extf %4 : vector<16x128xbf16> to vector<16x128xf32>
    %c0_4 = arith.constant 0 : index
    %c0_5 = arith.constant 0 : index
    %6 = vector.load %arg11[%c0_4, %c0_5] : memref<16x384xf32, #tpu.memory_space<vmem>>, vector<16x384xf32>
    %7 = vector.extract_strided_slice %6 {offsets = [0, 0], sizes = [16, 128], strides = [1, 1]} : vector<16x384xf32> to vector<16x128xf32>
    %8 = vector.extract_strided_slice %3 {offsets = [0, 0], sizes = [128, 128], strides = [1, 1]} : vector<128x384xf32> to vector<128x128xf32>
    %cst = arith.constant dense<0.000000e+00> : vector<16x128xf32>
    %9 = tpu.matmul %7, %8, %cst {dimension_numbers = #tpu.dot_dimension_numbers<[1], [1], [0], [0], [0, 0, 1, 0], [], []>} : vector<16x128xf32>, vector<128x128xf32>, vector<16x128xf32> -> vector<16x128xf32>
    %10 = arith.addf %9, %5 : vector<16x128xf32>
    %c0_6 = arith.constant 0 : index
    %c0_7 = arith.constant 0 : index
    %11 = vector.load %arg12[%c0_6, %c0_7] : memref<16x384xf32, #tpu.memory_space<vmem>>, vector<16x128xf32>
    %cst_8 = arith.constant dense<0xFF800000> : vector<16xf32>
    %12 = vector.multi_reduction <maximumf>, %10, %cst_8 [1] : vector<16x128xf32> to vector<16xf32>
    %13 = vector.shape_cast %12 : vector<16xf32> to vector<16x1xf32>
    %14 = vector.broadcast %13 : vector<16x1xf32> to vector<16x128xf32>
    %15 = arith.maximumf %11, %14 : vector<16x128xf32>
    %16 = arith.subf %11, %15 : vector<16x128xf32>
    %17 = math.exp %16 : vector<16x128xf32>
    %18 = vector.extract_strided_slice %15 {offsets = [0, 0], sizes = [16, 1], strides = [1, 1]} : vector<16x128xf32> to vector<16x1xf32>
    %19 = vector.broadcast %18 : vector<16x1xf32> to vector<16x128xf32>
    %20 = arith.subf %10, %19 : vector<16x128xf32>
    %21 = math.exp %20 : vector<16x128xf32>
    %c0_9 = arith.constant 0 : index
    %c0_10 = arith.constant 0 : index
    %22 = vector.load %arg13[%c0_9, %c0_10] : memref<16x384xf32, #tpu.memory_space<vmem>>, vector<16x128xf32>
    %23 = arith.mulf %17, %22 : vector<16x128xf32>
    %cst_11 = arith.constant dense<0.000000e+00> : vector<16xf32>
    %24 = vector.multi_reduction <add>, %21, %cst_11 [1] : vector<16x128xf32> to vector<16xf32>
    %25 = vector.shape_cast %24 : vector<16xf32> to vector<16x1xf32>
    %26 = vector.broadcast %25 : vector<16x1xf32> to vector<16x128xf32>
    %27 = arith.addf %23, %26 : vector<16x128xf32>
    %c0_12 = arith.constant 0 : index
    %c0_13 = arith.constant 0 : index
    %28 = vector.load %arg13[%c0_12, %c0_13] : memref<16x384xf32, #tpu.memory_space<vmem>>, vector<16x128xf32>
    tpu.vector_store %arg13[%c0_12, %c0_13], %27 {strides = array<i32>} : memref<16x384xf32, #tpu.memory_space<vmem>>, vector<16x128xf32>,
    %c0_14 = arith.constant 0 : index
    %c0_15 = arith.constant 0 : index
    %29 = vector.load %arg14[%c0_14, %c0_15] : memref<16x384xf32, #tpu.memory_space<vmem>>, vector<16x128xf32>
    %30 = arith.mulf %17, %29 : vector<16x128xf32>
    %cst_16 = arith.constant dense<0.000000e+00> : vector<16x128xf32>
    %31 = tpu.matmul %21, %8, %cst_16 {dimension_numbers = #tpu.dot_dimension_numbers<[1], [0], [0], [1], [0, 0, 1, 1], [], []>} : vector<16x128xf32>, vector<128x128xf32>, vector<16x128xf32> -> vector<16x128xf32>
    %32 = arith.addf %30, %31 : vector<16x128xf32>
    %c0_17 = arith.constant 0 : index
    %c0_18 = arith.constant 0 : index
    %33 = vector.load %arg14[%c0_17, %c0_18] : memref<16x384xf32, #tpu.memory_space<vmem>>, vector<16x128xf32>
    tpu.vector_store %arg14[%c0_17, %c0_18], %32 {strides = array<i32>} : memref<16x384xf32, #tpu.memory_space<vmem>>, vector<16x128xf32>,
    %c0_19 = arith.constant 0 : index
    %c0_20 = arith.constant 0 : index
    %34 = vector.load %arg12[%c0_19, %c0_20] : memref<16x384xf32, #tpu.memory_space<vmem>>, vector<16x128xf32>
    tpu.vector_store %arg12[%c0_19, %c0_20], %15 {strides = array<i32>} : memref<16x384xf32, #tpu.memory_space<vmem>>, vector<16x128xf32>,
    %35 = vector.extract_strided_slice %6 {offsets = [0, 128], sizes = [16, 128], strides = [1, 1]} : vector<16x384xf32> to vector<16x128xf32>
    %36 = vector.extract_strided_slice %3 {offsets = [0, 128], sizes = [128, 128], strides = [1, 1]} : vector<128x384xf32> to vector<128x128xf32>
    %cst_21 = arith.constant dense<0.000000e+00> : vector<16x128xf32>
    %37 = tpu.matmul %35, %36, %cst_21 {dimension_numbers = #tpu.dot_dimension_numbers<[1], [1], [0], [0], [0, 0, 1, 0], [], []>} : vector<16x128xf32>, vector<128x128xf32>, vector<16x128xf32> -> vector<16x128xf32>
    %38 = arith.addf %37, %5 : vector<16x128xf32>
    %c0_22 = arith.constant 0 : index
    %c128 = arith.constant 128 : index
    %39 = vector.load %arg12[%c0_22, %c128] : memref<16x384xf32, #tpu.memory_space<vmem>>, vector<16x128xf32>
    %cst_23 = arith.constant dense<0xFF800000> : vector<16xf32>
    %40 = vector.multi_reduction <maximumf>, %38, %cst_23 [1] : vector<16x128xf32> to vector<16xf32>
    %41 = vector.shape_cast %40 : vector<16xf32> to vector<16x1xf32>
    %42 = vector.broadcast %41 : vector<16x1xf32> to vector<16x128xf32>
    %43 = arith.maximumf %39, %42 : vector<16x128xf32>
    %44 = arith.subf %39, %43 : vector<16x128xf32>
    %45 = math.exp %44 : vector<16x128xf32>
    %46 = vector.extract_strided_slice %43 {offsets = [0, 0], sizes = [16, 1], strides = [1, 1]} : vector<16x128xf32> to vector<16x1xf32>
    %47 = vector.broadcast %46 : vector<16x1xf32> to vector<16x128xf32>
    %48 = arith.subf %38, %47 : vector<16x128xf32>
    %49 = math.exp %48 : vector<16x128xf32>
    %c0_24 = arith.constant 0 : index
    %c128_25 = arith.constant 128 : index
    %50 = vector.load %arg13[%c0_24, %c128_25] : memref<16x384xf32, #tpu.memory_space<vmem>>, vector<16x128xf32>
    %51 = arith.mulf %45, %50 : vector<16x128xf32>
    %cst_26 = arith.constant dense<0.000000e+00> : vector<16xf32>
    %52 = vector.multi_reduction <add>, %49, %cst_26 [1] : vector<16x128xf32> to vector<16xf32>
    %53 = vector.shape_cast %52 : vector<16xf32> to vector<16x1xf32>
    %54 = vector.broadcast %53 : vector<16x1xf32> to vector<16x128xf32>
    %55 = arith.addf %51, %54 : vector<16x128xf32>
    %c0_27 = arith.constant 0 : index
    %c128_28 = arith.constant 128 : index
    %56 = vector.load %arg13[%c0_27, %c128_28] : memref<16x384xf32, #tpu.memory_space<vmem>>, vector<16x128xf32>
    tpu.vector_store %arg13[%c0_27, %c128_28], %55 {strides = array<i32>} : memref<16x384xf32, #tpu.memory_space<vmem>>, vector<16x128xf32>,
    %c0_29 = arith.constant 0 : index
    %c128_30 = arith.constant 128 : index
    %57 = vector.load %arg14[%c0_29, %c128_30] : memref<16x384xf32, #tpu.memory_space<vmem>>, vector<16x128xf32>
    %58 = arith.mulf %45, %57 : vector<16x128xf32>
    %cst_31 = arith.constant dense<0.000000e+00> : vector<16x128xf32>
    %59 = tpu.matmul %49, %36, %cst_31 {dimension_numbers = #tpu.dot_dimension_numbers<[1], [0], [0], [1], [0, 0, 1, 1], [], []>} : vector<16x128xf32>, vector<128x128xf32>, vector<16x128xf32> -> vector<16x128xf32>
    %60 = arith.addf %58, %59 : vector<16x128xf32>
    %c0_32 = arith.constant 0 : index
    %c128_33 = arith.constant 128 : index
    %61 = vector.load %arg14[%c0_32, %c128_33] : memref<16x384xf32, #tpu.memory_space<vmem>>, vector<16x128xf32>
    tpu.vector_store %arg14[%c0_32, %c128_33], %60 {strides = array<i32>} : memref<16x384xf32, #tpu.memory_space<vmem>>, vector<16x128xf32>,
    %c0_34 = arith.constant 0 : index
    %c128_35 = arith.constant 128 : index
    %62 = vector.load %arg12[%c0_34, %c128_35] : memref<16x384xf32, #tpu.memory_space<vmem>>, vector<16x128xf32>
    tpu.vector_store %arg12[%c0_34, %c128_35], %43 {strides = array<i32>} : memref<16x384xf32, #tpu.memory_space<vmem>>, vector<16x128xf32>,
    %63 = vector.extract_strided_slice %6 {offsets = [0, 256], sizes = [16, 128], strides = [1, 1]} : vector<16x384xf32> to vector<16x128xf32>
    %64 = vector.extract_strided_slice %3 {offsets = [0, 256], sizes = [128, 128], strides = [1, 1]} : vector<128x384xf32> to vector<128x128xf32>
    %cst_36 = arith.constant dense<0.000000e+00> : vector<16x128xf32>
    %65 = tpu.matmul %63, %64, %cst_36 {dimension_numbers = #tpu.dot_dimension_numbers<[1], [1], [0], [0], [0, 0, 1, 0], [], []>} : vector<16x128xf32>, vector<128x128xf32>, vector<16x128xf32> -> vector<16x128xf32>
    %66 = arith.addf %65, %5 : vector<16x128xf32>
    %c0_37 = arith.constant 0 : index
    %c256 = arith.constant 256 : index
    %67 = vector.load %arg12[%c0_37, %c256] : memref<16x384xf32, #tpu.memory_space<vmem>>, vector<16x128xf32>
    %cst_38 = arith.constant dense<0xFF800000> : vector<16xf32>
    %68 = vector.multi_reduction <maximumf>, %66, %cst_38 [1] : vector<16x128xf32> to vector<16xf32>
    %69 = vector.shape_cast %68 : vector<16xf32> to vector<16x1xf32>
    %70 = vector.broadcast %69 : vector<16x1xf32> to vector<16x128xf32>
    %71 = arith.maximumf %67, %70 : vector<16x128xf32>
    %72 = arith.subf %67, %71 : vector<16x128xf32>
    %73 = math.exp %72 : vector<16x128xf32>
    %74 = vector.extract_strided_slice %71 {offsets = [0, 0], sizes = [16, 1], strides = [1, 1]} : vector<16x128xf32> to vector<16x1xf32>
    %75 = vector.broadcast %74 : vector<16x1xf32> to vector<16x128xf32>
    %76 = arith.subf %66, %75 : vector<16x128xf32>
    %77 = math.exp %76 : vector<16x128xf32>
    %c0_39 = arith.constant 0 : index
    %c256_40 = arith.constant 256 : index
    %78 = vector.load %arg13[%c0_39, %c256_40] : memref<16x384xf32, #tpu.memory_space<vmem>>, vector<16x128xf32>
    %79 = arith.mulf %73, %78 : vector<16x128xf32>
    %cst_41 = arith.constant dense<0.000000e+00> : vector<16xf32>
    %80 = vector.multi_reduction <add>, %77, %cst_41 [1] : vector<16x128xf32> to vector<16xf32>
    %81 = vector.shape_cast %80 : vector<16xf32> to vector<16x1xf32>
    %82 = vector.broadcast %81 : vector<16x1xf32> to vector<16x128xf32>
    %83 = arith.addf %79, %82 : vector<16x128xf32>
    %c0_42 = arith.constant 0 : index
    %c256_43 = arith.constant 256 : index
    %84 = vector.load %arg13[%c0_42, %c256_43] : memref<16x384xf32, #tpu.memory_space<vmem>>, vector<16x128xf32>
    tpu.vector_store %arg13[%c0_42, %c256_43], %83 {strides = array<i32>} : memref<16x384xf32, #tpu.memory_space<vmem>>, vector<16x128xf32>,
    %c0_44 = arith.constant 0 : index
    %c256_45 = arith.constant 256 : index
    %85 = vector.load %arg14[%c0_44, %c256_45] : memref<16x384xf32, #tpu.memory_space<vmem>>, vector<16x128xf32>
    %86 = arith.mulf %73, %85 : vector<16x128xf32>
    %cst_46 = arith.constant dense<0.000000e+00> : vector<16x128xf32>
    %87 = tpu.matmul %77, %64, %cst_46 {dimension_numbers = #tpu.dot_dimension_numbers<[1], [0], [0], [1], [0, 0, 1, 1], [], []>} : vector<16x128xf32>, vector<128x128xf32>, vector<16x128xf32> -> vector<16x128xf32>
    %88 = arith.addf %86, %87 : vector<16x128xf32>
    %c0_47 = arith.constant 0 : index
    %c256_48 = arith.constant 256 : index
    %89 = vector.load %arg14[%c0_47, %c256_48] : memref<16x384xf32, #tpu.memory_space<vmem>>, vector<16x128xf32>
    tpu.vector_store %arg14[%c0_47, %c256_48], %88 {strides = array<i32>} : memref<16x384xf32, #tpu.memory_space<vmem>>, vector<16x128xf32>,
    %c0_49 = arith.constant 0 : index
    %c256_50 = arith.constant 256 : index
    %90 = vector.load %arg12[%c0_49, %c256_50] : memref<16x384xf32, #tpu.memory_space<vmem>>, vector<16x128xf32>
    tpu.vector_store %arg12[%c0_49, %c256_50], %71 {strides = array<i32>} : memref<16x384xf32, #tpu.memory_space<vmem>>, vector<16x128xf32>,
    %c0_i32_51 = arith.constant 0 : i32
    %91 = arith.cmpi eq, %arg1, %c0_i32_51 : i32
    %92 = arith.extui %91 : i1 to i32
    %c0_i32_52 = arith.constant 0 : i32
    %93 = arith.cmpi ne, %92, %c0_i32_52 : i32
    scf.if %93 {
      %c0_53 = arith.constant 0 : index
      %c0_54 = arith.constant 0 : index
      %94 = vector.load %arg2[%c0_53, %c0_54] : memref<16x384xf32, #tpu.memory_space<vmem>>, vector<16x384xf32>
      %95 = vector.extract_strided_slice %94 {offsets = [0, 0], sizes = [16, 128], strides = [1, 1]} : vector<16x384xf32> to vector<16x128xf32>
      %c0_55 = arith.constant 0 : index
      %c0_56 = arith.constant 0 : index
      %96 = vector.load %arg14[%c0_55, %c0_56] : memref<16x384xf32, #tpu.memory_space<vmem>>, vector<16x128xf32>
      %c0_57 = arith.constant 0 : index
      %c0_58 = arith.constant 0 : index
      %97 = vector.load %arg13[%c0_57, %c0_58] : memref<16x384xf32, #tpu.memory_space<vmem>>, vector<16x128xf32>
      %98 = arith.divf %96, %97 : vector<16x128xf32>
      %99 = arith.addf %95, %98 : vector<16x128xf32>
      %c0_59 = arith.constant 0 : index
      %c0_60 = arith.constant 0 : index
      %100 = vector.load %arg14[%c0_59, %c0_60] : memref<16x384xf32, #tpu.memory_space<vmem>>, vector<16x128xf32>
      tpu.vector_store %arg14[%c0_59, %c0_60], %99 {strides = array<i32>} : memref<16x384xf32, #tpu.memory_space<vmem>>, vector<16x128xf32>,
      %101 = vector.extract_strided_slice %94 {offsets = [0, 128], sizes = [16, 128], strides = [1, 1]} : vector<16x384xf32> to vector<16x128xf32>
      %c0_61 = arith.constant 0 : index
      %c128_62 = arith.constant 128 : index
      %102 = vector.load %arg14[%c0_61, %c128_62] : memref<16x384xf32, #tpu.memory_space<vmem>>, vector<16x128xf32>
      %c0_63 = arith.constant 0 : index
      %c128_64 = arith.constant 128 : index
      %103 = vector.load %arg13[%c0_63, %c128_64] : memref<16x384xf32, #tpu.memory_space<vmem>>, vector<16x128xf32>
      %104 = arith.divf %102, %103 : vector<16x128xf32>
      %105 = arith.addf %101, %104 : vector<16x128xf32>
      %c0_65 = arith.constant 0 : index
      %c128_66 = arith.constant 128 : index
      %106 = vector.load %arg14[%c0_65, %c128_66] : memref<16x384xf32, #tpu.memory_space<vmem>>, vector<16x128xf32>
      tpu.vector_store %arg14[%c0_65, %c128_66], %105 {strides = array<i32>} : memref<16x384xf32, #tpu.memory_space<vmem>>, vector<16x128xf32>,
      %107 = vector.extract_strided_slice %94 {offsets = [0, 256], sizes = [16, 128], strides = [1, 1]} : vector<16x384xf32> to vector<16x128xf32>
      %c0_67 = arith.constant 0 : index
      %c256_68 = arith.constant 256 : index
      %108 = vector.load %arg14[%c0_67, %c256_68] : memref<16x384xf32, #tpu.memory_space<vmem>>, vector<16x128xf32>
      %c0_69 = arith.constant 0 : index
      %c256_70 = arith.constant 256 : index
      %109 = vector.load %arg13[%c0_69, %c256_70] : memref<16x384xf32, #tpu.memory_space<vmem>>, vector<16x128xf32>
      %110 = arith.divf %108, %109 : vector<16x128xf32>
      %111 = arith.addf %107, %110 : vector<16x128xf32>
      %c0_71 = arith.constant 0 : index
      %c256_72 = arith.constant 256 : index
      %112 = vector.load %arg14[%c0_71, %c256_72] : memref<16x384xf32, #tpu.memory_space<vmem>>, vector<16x128xf32>
      tpu.vector_store %arg14[%c0_71, %c256_72], %111 {strides = array<i32>} : memref<16x384xf32, #tpu.memory_space<vmem>>, vector<16x128xf32>,
      %c0_73 = arith.constant 0 : index
      %c0_74 = arith.constant 0 : index
      %113 = vector.load %arg14[%c0_73, %c0_74] : memref<16x384xf32, #tpu.memory_space<vmem>>, vector<16x384xf32>
      %c0_75 = arith.constant 0 : index
      %c0_76 = arith.constant 0 : index
      %114 = vector.load %arg8[%c0_75, %c0_76] : memref<384x384xf32, #tpu.memory_space<vmem>>, vector<384x384xf32>
      %cst_77 = arith.constant dense<0.000000e+00> : vector<16x384xf32>
      %115 = tpu.matmul %113, %114, %cst_77 {dimension_numbers = #tpu.dot_dimension_numbers<[1], [0], [0], [1], [0, 0, 1, 1], [], []>} : vector<16x384xf32>, vector<384x384xf32>, vector<16x384xf32> -> vector<16x384xf32>
      %c0_78 = arith.constant 0 : index
      %c0_79 = arith.constant 0 : index
      %116 = vector.load %arg9[%c0_78, %c0_79] : memref<1x384xf32, #tpu.memory_space<vmem>>, vector<1x384xf32>
      %117 = vector.broadcast %116 : vector<1x384xf32> to vector<16x384xf32>
      %118 = arith.addf %115, %117 : vector<16x384xf32>
      %cst_80 = arith.constant 0.000000e+00 : f32
      %119 = vector.broadcast %cst_80 : f32 to vector<16x384xf32>
      %120 = arith.cmpf oge, %118, %119 : vector<16x384xf32>
      %cst_81 = arith.constant 2.000000e-01 : f32
      %121 = vector.broadcast %cst_81 : f32 to vector<16x384xf32>
      %122 = arith.mulf %121, %118 : vector<16x384xf32>
      %123 = arith.select %120, %118, %122 : vector<16x384xi1>, vector<16x384xf32>
      %124 = arith.addf %94, %123 : vector<16x384xf32>
      %c0_82 = arith.constant 0 : index
      %c0_83 = arith.constant 0 : index
      %125 = vector.load %arg10[%c0_82, %c0_83] : memref<16x384xf32, #tpu.memory_space<vmem>>, vector<16x384xf32>
      tpu.vector_store %arg10[%c0_82, %c0_83], %124 {strides = array<i32>} : memref<16x384xf32, #tpu.memory_space<vmem>>, vector<16x384xf32>,
    } else {
    }
    return
  }
  func.func @transform_0(%arg0: i32, %arg1: i32) -> (i32, i32) {
    %c0_i32 = arith.constant 0 : i32
    %c0_i32_0 = arith.constant 0 : i32
    return %arg0, %c0_i32 : i32, i32
  }
  func.func @transform_1(%arg0: i32, %arg1: i32) -> (i32, i32) {
    %c0_i32 = arith.constant 0 : i32
    %c0_i32_0 = arith.constant 0 : i32
    return %arg0, %c0_i32 : i32, i32
  }
  func.func @transform_2(%arg0: i32, %arg1: i32) -> (i32, i32) {
    %c0_i32 = arith.constant 0 : i32
    %c0_i32_0 = arith.constant 0 : i32
    return %arg1, %c0_i32 : i32, i32
  }
  func.func @transform_3(%arg0: i32, %arg1: i32) -> (i32, i32) {
    %c0_i32 = arith.constant 0 : i32
    return %arg0, %arg1 : i32, i32
  }
  func.func @transform_4(%arg0: i32, %arg1: i32) -> (i32, i32) {
    %c0_i32 = arith.constant 0 : i32
    %c0_i32_0 = arith.constant 0 : i32
    %c0_i32_1 = arith.constant 0 : i32
    return %c0_i32, %c0_i32_0 : i32, i32
  }
  func.func @transform_5(%arg0: i32, %arg1: i32) -> (i32, i32) {
    %c0_i32 = arith.constant 0 : i32
    %c0_i32_0 = arith.constant 0 : i32
    %c0_i32_1 = arith.constant 0 : i32
    return %c0_i32, %c0_i32_0 : i32, i32
  }
  func.func @transform_6(%arg0: i32, %arg1: i32) -> (i32, i32) {
    %c0_i32 = arith.constant 0 : i32
    %c0_i32_0 = arith.constant 0 : i32
    %c0_i32_1 = arith.constant 0 : i32
    return %c0_i32, %c0_i32_0 : i32, i32
  }
  func.func @transform_7(%arg0: i32, %arg1: i32) -> (i32, i32) {
    %c0_i32 = arith.constant 0 : i32
    %c0_i32_0 = arith.constant 0 : i32
    %c0_i32_1 = arith.constant 0 : i32
    return %c0_i32, %c0_i32_0 : i32, i32
  }
  func.func @transform_8(%arg0: i32, %arg1: i32) -> (i32, i32) {
    %c0_i32 = arith.constant 0 : i32
    %c0_i32_0 = arith.constant 0 : i32
    return %arg0, %c0_i32 : i32, i32
  }
}

</mosaic_0001>

<llo_original>
// kernel: tpu_custom_call.1
$region0: #{tpu_custom_call.1}
  #allocation0 [shape = 'u32[]', space=smem, size = 0x4, offset = 0x4, fixed_abs, tag = 'smem constant byte address 0x4 - core index']
  #allocation1 [shape = 'u32[72,128]{1,0:T(1,128)}', space=vmem, size = 0x9000, scoped, tag = 'internal scratch']
  #allocation2 [shape = 'f32[16,384]{1,0:T(8,128)}', space=vmem, size = 0x6000, scoped, tag = 'scratch operand']
  #allocation3 [shape = 'f32[16,384]{1,0:T(8,128)}', space=vmem, size = 0x6000, scoped, tag = 'scratch operand']
  #allocation4 [shape = 'f32[16,384]{1,0:T(8,128)}', space=vmem, size = 0x6000, scoped, tag = 'scratch operand']
  #allocation5 [shape = 'f32[16,384]{1,0:T(8,128)}', space=vmem, size = 0x6000, scoped, tag = 'scratch operand']
  %s0 = inlined_call_operand.hbm [shape: f32[16,384], index: 0, kind: input, shape index: {}]
  %s1 = inlined_call_operand.hbm [shape: f32[16,384], index: 1, kind: input, shape index: {}]
  %s2 = inlined_call_operand.hbm [shape: f32[128,384], index: 2, kind: input, shape index: {}]
  %s3 = inlined_call_operand.hbm [shape: bf16[16,128], index: 3, kind: input, shape index: {}]
  %s4 = inlined_call_operand.hbm [shape: f32[384,384], index: 4, kind: input, shape index: {}]
  %s5 = inlined_call_operand.vmem [shape: f32[1,384], index: 5, kind: input, shape index: {}]
  %s6 = inlined_call_operand.hbm [shape: f32[384,384], index: 6, kind: input, shape index: {}]
  %s7 = inlined_call_operand.vmem [shape: f32[1,384], index: 7, kind: input, shape index: {}]
  %s8 = inlined_call_operand.hbm [shape: f32[16,384], index: 8, kind: output, shape index: {}]
  %s9 = sld [smem:[#allocation0]]
  $region74: #{tpu_custom_call.1} parent=0
    _
  %s11 = ssub.s32 1, %s9
  %s12 = scalar_select 0, %s11, %s9
  $region1: #{tpu_custom_call.1} parent=0
    #allocation6 [shape = 'u8[24576]{0}', space=vmem, size = 0x6000, scoped, tag = 'input window, operand 0, single buffered']
    #allocation7 [shape = 's32[1]{0}', space=sflag, size = 0x4, scoped, tag = 'scoped memory for tpu_custom_call.1']
    #allocation8 [shape = 's32[1]{0}', space=sflag, size = 0x4, scoped, tag = 'scoped memory for tpu_custom_call.1']
    #allocation9 [shape = 'u8[24576]{0}', space=vmem, size = 0x6000, scoped, tag = 'input window, operand 1, single buffered']
    #allocation10 [shape = 's32[1]{0}', space=sflag, size = 0x4, scoped, tag = 'scoped memory for tpu_custom_call.1']
    #allocation11 [shape = 'u8[196608]{0}', space=vmem, size = 0x30000, scoped, tag = 'input window, operand 2, single buffered']
    #allocation12 [shape = 'u8[4096]{0}', space=vmem, size = 0x1000, scoped, tag = 'input window, operand 3, single buffered']
    #allocation13 [shape = 's32[1]{0}', space=sflag, size = 0x4, scoped, tag = 'scoped memory for tpu_custom_call.1']
    #allocation14 [shape = 'u8[589824]{0}', space=vmem, size = 0x90000, scoped, tag = 'input window, operand 4, single buffered']
    #allocation15 [shape = 'u8[589824]{0}', space=vmem, size = 0x90000, scoped, tag = 'input window, operand 6, single buffered']
    #allocation16 [shape = 's32[1]{0}', space=sflag, size = 0x4, scoped, tag = 'scoped memory for tpu_custom_call.1']
    #allocation17 [shape = 'u8[24576]{0}', space=vmem, size = 0x6000, scoped, tag = 'output window, operand 0, single buffered']
    %13 = vsyncpa [#allocation7], 0
    %14 = vsyncpa [#allocation10], 0
    %15 = vsyncpa [#allocation13], 0
    %16 = vsyncpa [#allocation16], 0
    %17 = vsyncpa [#allocation8], 0
    // Predicated region
    $region2: #{tpu_custom_call.1} parent=1 // pred_check
      _
    $region3: #{tpu_custom_call.1} parent=1 // pred_check_branch
      %19 = sbr.rel (0) target = $region5
    $region4: #{tpu_custom_call.1} parent=1 // pred_region
      %21 = vsyncadd [#allocation7], 0
      %s22 = sshll.u32 %s0, 4
      %s23 = int_to_ptr.hbm [resolvable:$true] %s22
      %s24 = sshll.u32 [#allocation6], 4
      %s25 = int_to_ptr.vmem [resolvable:$true] %s24
      %30 = dma.hbm_to_vmem [thread:$0]  %s23, 768, %s25, [#allocation7], 384, 384, 24
    $region5: #{tpu_custom_call.1} parent=1 // pred_fallthru
      _
    // Predicated region
    $region6: #{tpu_custom_call.1} parent=1 // pred_check
      _
    $region7: #{tpu_custom_call.1} parent=1 // pred_check_branch
      %32 = sbr.rel (0) target = $region9
    $region8: #{tpu_custom_call.1} parent=1 // pred_region
      %34 = vsyncadd [#allocation10], 0
      %s35 = sshll.u32 %s1, 4
      %s36 = int_to_ptr.hbm [resolvable:$true] %s35
      %s37 = sshll.u32 [#allocation9], 4
      %s38 = int_to_ptr.vmem [resolvable:$true] %s37
      %43 = dma.hbm_to_vmem [thread:$0]  %s36, 768, %s38, [#allocation10], 384, 384, 24
    $region9: #{tpu_custom_call.1} parent=1 // pred_fallthru
      _
    // Predicated region
    $region10: #{tpu_custom_call.1} parent=1 // pred_check
      _
    $region11: #{tpu_custom_call.1} parent=1 // pred_check_branch
      %45 = sbr.rel (0) target = $region13
    $region12: #{tpu_custom_call.1} parent=1 // pred_region
      %47 = vsyncadd [#allocation10], 0
      %s48 = sshll.u32 %s2, 4
      %s49 = int_to_ptr.hbm [resolvable:$true] %s48
      %s50 = sshll.u32 [#allocation11], 4
      %s51 = int_to_ptr.vmem [resolvable:$true] %s50
      %56 = dma.hbm_to_vmem [thread:$0]  %s49, 6144, %s51, [#allocation10], 384, 384, 24
    $region13: #{tpu_custom_call.1} parent=1 // pred_fallthru
      _
    // Predicated region
    $region14: #{tpu_custom_call.1} parent=1 // pred_check
      _
    $region15: #{tpu_custom_call.1} parent=1 // pred_check_branch
      %58 = sbr.rel (0) target = $region17
    $region16: #{tpu_custom_call.1} parent=1 // pred_region
      %60 = vsyncadd [#allocation13], 0
      %s61 = sshll.u32 %s3, 4
      %s62 = int_to_ptr.hbm [resolvable:$true] %s61
      %s63 = sshll.u32 [#allocation12], 4
      %s64 = int_to_ptr.vmem [resolvable:$true] %s63
      %69 = dma.hbm_to_vmem [thread:$0]  %s62, 128, %s64, [#allocation13], 64, 64, 4
    $region17: #{tpu_custom_call.1} parent=1 // pred_fallthru
      _
    // Predicated region
    $region18: #{tpu_custom_call.1} parent=1 // pred_check
      _
    $region19: #{tpu_custom_call.1} parent=1 // pred_check_branch
      %71 = sbr.rel (0) target = $region21
    $region20: #{tpu_custom_call.1} parent=1 // pred_region
      %73 = vsyncadd [#allocation13], 0
      %s74 = sshll.u32 %s4, 4
      %s75 = int_to_ptr.hbm [resolvable:$true] %s74
      %s76 = sshll.u32 [#allocation14], 4
      %s77 = int_to_ptr.vmem [resolvable:$true] %s76
      %82 = dma.hbm_to_vmem [thread:$0]  %s75, 18432, %s77, [#allocation13], 384, 384, 24
    $region21: #{tpu_custom_call.1} parent=1 // pred_fallthru
      _
    // Predicated region
    $region22: #{tpu_custom_call.1} parent=1 // pred_check
      _
    $region23: #{tpu_custom_call.1} parent=1 // pred_check_branch
      %84 = sbr.rel (0) target = $region25
    $region24: #{tpu_custom_call.1} parent=1 // pred_region
      _
    $region25: #{tpu_custom_call.1} parent=1 // pred_fallthru
      _
    // Predicated region
    $region26: #{tpu_custom_call.1} parent=1 // pred_check
      _
    $region27: #{tpu_custom_call.1} parent=1 // pred_check_branch
      %86 = sbr.rel (0) target = $region29
    $region28: #{tpu_custom_call.1} parent=1 // pred_region
      %88 = vsyncadd [#allocation16], 0
      %s89 = sshll.u32 %s6, 4
      %s90 = int_to_ptr.hbm [resolvable:$true] %s89
      %s91 = sshll.u32 [#allocation15], 4
      %s92 = int_to_ptr.vmem [resolvable:$true] %s91
      %97 = dma.hbm_to_vmem [thread:$0]  %s90, 18432, %s92, [#allocation16], 384, 384, 24
    $region29: #{tpu_custom_call.1} parent=1 // pred_fallthru
      _
    // Predicated region
    $region30: #{tpu_custom_call.1} parent=1 // pred_check
      _
    $region31: #{tpu_custom_call.1} parent=1 // pred_check_branch
      %99 = sbr.rel (0) target = $region33
    $region32: #{tpu_custom_call.1} parent=1 // pred_region
      _
    $region33: #{tpu_custom_call.1} parent=1 // pred_fallthru
      _
    // Predicated region
    $region34: #{tpu_custom_call.1} parent=1 // pred_check
      _
    $region35: #{tpu_custom_call.1} parent=1 // pred_check_branch
      %101 = sbr.rel (0) target = $region37
    $region36: #{tpu_custom_call.1} parent=1 // pred_region
      %103 = dma.done [#allocation7], 768
    $region37: #{tpu_custom_call.1} parent=1 // pred_fallthru
      _
    // Predicated region
    $region38: #{tpu_custom_call.1} parent=1 // pred_check
      _
    $region39: #{tpu_custom_call.1} parent=1 // pred_check_branch
      %105 = sbr.rel (0) target = $region41
    $region40: #{tpu_custom_call.1} parent=1 // pred_region
      %107 = dma.done [#allocation10], 768
    $region41: #{tpu_custom_call.1} parent=1 // pred_fallthru
      _
    // Predicated region
    $region42: #{tpu_custom_call.1} parent=1 // pred_check
      _
    $region43: #{tpu_custom_call.1} parent=1 // pred_check_branch
      %109 = sbr.rel (0) target = $region45
    $region44: #{tpu_custom_call.1} parent=1 // pred_region
      %111 = dma.done [#allocation10], 6144
    $region45: #{tpu_custom_call.1} parent=1 // pred_fallthru
      _
    // Predicated region
    $region46: #{tpu_custom_call.1} parent=1 // pred_check
      _
    $region47: #{tpu_custom_call.1} parent=1 // pred_check_branch
      %113 = sbr.rel (0) target = $region49
    $region48: #{tpu_custom_call.1} parent=1 // pred_region
      %115 = dma.done [#allocation13], 128
    $region49: #{tpu_custom_call.1} parent=1 // pred_fallthru
      _
    // Predicated region
    $region50: #{tpu_custom_call.1} parent=1 // pred_check
      _
    $region51: #{tpu_custom_call.1} parent=1 // pred_check_branch
      %117 = sbr.rel (0) target = $region53
    $region52: #{tpu_custom_call.1} parent=1 // pred_region
      %119 = dma.done [#allocation13], 18432
    $region53: #{tpu_custom_call.1} parent=1 // pred_fallthru
      _
    // Predicated region
    $region54: #{tpu_custom_call.1} parent=1 // pred_check
      _
    $region55: #{tpu_custom_call.1} parent=1 // pred_check_branch
      %121 = sbr.rel (0) target = $region57
    $region56: #{tpu_custom_call.1} parent=1 // pred_region
      %123 = dma.done [#allocation16], 18432
    $region57: #{tpu_custom_call.1} parent=1 // pred_fallthru
      _
    %p124 = scmp.eq.s32.totalorder 0, 0
    // Predicated region
    $region58: #{tpu_custom_call.1} parent=1 // pred_check
      %p125 = pneg %p124
    $region59: #{tpu_custom_call.1} parent=1 // pred_check_branch
      %127 = sbr.rel (%p125) target = $region61
    $region60: #{tpu_custom_call.1} parent=1 // pred_region
      %v128 = vld [vmem:[#allocation9] sm:$0xff]
      %v129 = vld [vmem:[#allocation9 + $0x8] sm:$0xff]
      %v130 = vld [vmem:[#allocation9 + $0x10] sm:$0xff]
      %v131 = vld [vmem:[#allocation9 + $0x18] sm:$0xff]
      %v132 = vld [vmem:[#allocation9 + $0x20] sm:$0xff]
      %v133 = vld [vmem:[#allocation9 + $0x28] sm:$0xff]
      %v134 = vld [vmem:[#allocation14] sm:$0xff]
      %v135 = vld [vmem:[#allocation14 + $0x8] sm:$0xff]
      %v136 = vld [vmem:[#allocation14 + $0x10] sm:$0xff]
      %v137 = vld [vmem:[#allocation14 + $0x18] sm:$0xff]
      %v138 = vld [vmem:[#allocation14 + $0x20] sm:$0xff]
      %v139 = vld [vmem:[#allocation14 + $0x28] sm:$0xff]
      %v140 = vld [vmem:[#allocation14 + $0x30] sm:$0xff]
      %v141 = vld [vmem:[#allocation14 + $0x38] sm:$0xff]
      %v142 = vld [vmem:[#allocation14 + $0x40] sm:$0xff]
      %v143 = vld [vmem:[#allocation14 + $0x48] sm:$0xff]
      %v144 = vld [vmem:[#allocation14 + $0x50] sm:$0xff]
      %v145 = vld [vmem:[#allocation14 + $0x58] sm:$0xff]
      %v146 = vld [vmem:[#allocation14 + $0x60] sm:$0xff]
      %v147 = vld [vmem:[#allocation14 + $0x68] sm:$0xff]
      %v148 = vld [vmem:[#allocation14 + $0x70] sm:$0xff]
      %v149 = vld [vmem:[#allocation14 + $0x78] sm:$0xff]
      %v150 = vld [vmem:[#allocation14 + $0x80] sm:$0xff]
      %v151 = vld [vmem:[#allocation14 + $0x88] sm:$0xff]
      %v152 = vld [vmem:[#allocation14 + $0x90] sm:$0xff]
      %v153 = vld [vmem:[#allocation14 + $0x98] sm:$0xff]
      %v154 = vld [vmem:[#allocation14 + $0xa0] sm:$0xff]
      %v155 = vld [vmem:[#allocation14 + $0xa8] sm:$0xff]
      %v156 = vld [vmem:[#allocation14 + $0xb0] sm:$0xff]
      %v157 = vld [vmem:[#allocation14 + $0xb8] sm:$0xff]
      %v158 = vld [vmem:[#allocation14 + $0xc0] sm:$0xff]
      %v159 = vld [vmem:[#allocation14 + $0xc8] sm:$0xff]
      %v160 = vld [vmem:[#allocation14 + $0xd0] sm:$0xff]
      %v161 = vld [vmem:[#allocation14 + $0xd8] sm:$0xff]
      %v162 = vld [vmem:[#allocation14 + $0xe0] sm:$0xff]
      %v163 = vld [vmem:[#allocation14 + $0xe8] sm:$0xff]
      %v164 = vld [vmem:[#allocation14 + $0xf0] sm:$0xff]
      %v165 = vld [vmem:[#allocation14 + $0xf8] sm:$0xff]
      %v166 = vld [vmem:[#allocation14 + $0x100] sm:$0xff]
      %v167 = vld [vmem:[#allocation14 + $0x108] sm:$0xff]
      %v168 = vld [vmem:[#allocation14 + $0x110] sm:$0xff]
      %v169 = vld [vmem:[#allocation14 + $0x118] sm:$0xff]
      %v170 = vld [vmem:[#allocation14 + $0x120] sm:$0xff]
      %v171 = vld [vmem:[#allocation14 + $0x128] sm:$0xff]
      %v172 = vld [vmem:[#allocation14 + $0x130] sm:$0xff]
      %v173 = vld [vmem:[#allocation14 + $0x138] sm:$0xff]
      %v174 = vld [vmem:[#allocation14 + $0x140] sm:$0xff]
      %v175 = vld [vmem:[#allocation14 + $0x148] sm:$0xff]
      %v176 = vld [vmem:[#allocation14 + $0x150] sm:$0xff]
      %v177 = vld [vmem:[#allocation14 + $0x158] sm:$0xff]
      %v178 = vld [vmem:[#allocation14 + $0x160] sm:$0xff]
      %v179 = vld [vmem:[#allocation14 + $0x168] sm:$0xff]
      %v180 = vld [vmem:[#allocation14 + $0x170] sm:$0xff]
      %v181 = vld [vmem:[#allocation14 + $0x178] sm:$0xff]
      %v182 = vld [vmem:[#allocation14 + $0x180] sm:$0xff]
      %v183 = vld [vmem:[#allocation14 + $0x188] sm:$0xff]
      %v184 = vld [vmem:[#allocation14 + $0x190] sm:$0xff]
      %v185 = vld [vmem:[#allocation14 + $0x198] sm:$0xff]
      %v186 = vld [vmem:[#allocation14 + $0x1a0] sm:$0xff]
      %v187 = vld [vmem:[#allocation14 + $0x1a8] sm:$0xff]
      %v188 = vld [vmem:[#allocation14 + $0x1b0] sm:$0xff]
      %v189 = vld [vmem:[#allocation14 + $0x1b8] sm:$0xff]
      %v190 = vld [vmem:[#allocation14 + $0x1c0] sm:$0xff]
      %v191 = vld [vmem:[#allocation14 + $0x1c8] sm:$0xff]
      %v192 = vld [vmem:[#allocation14 + $0x1d0] sm:$0xff]
      %v193 = vld [vmem:[#allocation14 + $0x1d8] sm:$0xff]
      %v194 = vld [vmem:[#allocation14 + $0x1e0] sm:$0xff]
      %v195 = vld [vmem:[#allocation14 + $0x1e8] sm:$0xff]
      %v196 = vld [vmem:[#allocation14 + $0x1f0] sm:$0xff]
      %v197 = vld [vmem:[#allocation14 + $0x1f8] sm:$0xff]
      %v198 = vld [vmem:[#allocation14 + $0x200] sm:$0xff]
      %v199 = vld [vmem:[#allocation14 + $0x208] sm:$0xff]
      %v200 = vld [vmem:[#allocation14 + $0x210] sm:$0xff]
      %v201 = vld [vmem:[#allocation14 + $0x218] sm:$0xff]
      %v202 = vld [vmem:[#allocation14 + $0x220] sm:$0xff]
      %v203 = vld [vmem:[#allocation14 + $0x228] sm:$0xff]
      %v204 = vld [vmem:[#allocation14 + $0x230] sm:$0xff]
      %v205 = vld [vmem:[#allocation14 + $0x238] sm:$0xff]
      %v206 = vld [vmem:[#allocation14 + $0x240] sm:$0xff]
      %v207 = vld [vmem:[#allocation14 + $0x248] sm:$0xff]
      %v208 = vld [vmem:[#allocation14 + $0x250] sm:$0xff]
      %v209 = vld [vmem:[#allocation14 + $0x258] sm:$0xff]
      %v210 = vld [vmem:[#allocation14 + $0x260] sm:$0xff]
      %v211 = vld [vmem:[#allocation14 + $0x268] sm:$0xff]
      %v212 = vld [vmem:[#allocation14 + $0x270] sm:$0xff]
      %v213 = vld [vmem:[#allocation14 + $0x278] sm:$0xff]
      %v214 = vld [vmem:[#allocation14 + $0x280] sm:$0xff]
      %v215 = vld [vmem:[#allocation14 + $0x288] sm:$0xff]
      %v216 = vld [vmem:[#allocation14 + $0x290] sm:$0xff]
      %v217 = vld [vmem:[#allocation14 + $0x298] sm:$0xff]
      %v218 = vld [vmem:[#allocation14 + $0x2a0] sm:$0xff]
      %v219 = vld [vmem:[#allocation14 + $0x2a8] sm:$0xff]
      %v220 = vld [vmem:[#allocation14 + $0x2b0] sm:$0xff]
      %v221 = vld [vmem:[#allocation14 + $0x2b8] sm:$0xff]
      %v222 = vld [vmem:[#allocation14 + $0x2c0] sm:$0xff]
      %v223 = vld [vmem:[#allocation14 + $0x2c8] sm:$0xff]
      %v224 = vld [vmem:[#allocation14 + $0x2d0] sm:$0xff]
      %v225 = vld [vmem:[#allocation14 + $0x2d8] sm:$0xff]
      %v226 = vld [vmem:[#allocation14 + $0x2e0] sm:$0xff]
      %v227 = vld [vmem:[#allocation14 + $0x2e8] sm:$0xff]
      %v228 = vld [vmem:[#allocation14 + $0x2f0] sm:$0xff]
      %v229 = vld [vmem:[#allocation14 + $0x2f8] sm:$0xff]
      %v230 = vld [vmem:[#allocation14 + $0x300] sm:$0xff]
      %v231 = vld [vmem:[#allocation14 + $0x308] sm:$0xff]
      %v232 = vld [vmem:[#allocation14 + $0x310] sm:$0xff]
      %v233 = vld [vmem:[#allocation14 + $0x318] sm:$0xff]
      %v234 = vld [vmem:[#allocation14 + $0x320] sm:$0xff]
      %v235 = vld [vmem:[#allocation14 + $0x328] sm:$0xff]
      %v236 = vld [vmem:[#allocation14 + $0x330] sm:$0xff]
      %v237 = vld [vmem:[#allocation14 + $0x338] sm:$0xff]
      %v238 = vld [vmem:[#allocation14 + $0x340] sm:$0xff]
      %v239 = vld [vmem:[#allocation14 + $0x348] sm:$0xff]
      %v240 = vld [vmem:[#allocation14 + $0x350] sm:$0xff]
      %v241 = vld [vmem:[#allocation14 + $0x358] sm:$0xff]
      %v242 = vld [vmem:[#allocation14 + $0x360] sm:$0xff]
      %v243 = vld [vmem:[#allocation14 + $0x368] sm:$0xff]
      %v244 = vld [vmem:[#allocation14 + $0x370] sm:$0xff]
      %v245 = vld [vmem:[#allocation14 + $0x378] sm:$0xff]
      %v246 = vld [vmem:[#allocation14 + $0x380] sm:$0xff]
      %v247 = vld [vmem:[#allocation14 + $0x388] sm:$0xff]
      %v248 = vld [vmem:[#allocation14 + $0x390] sm:$0xff]
      %v249 = vld [vmem:[#allocation14 + $0x398] sm:$0xff]
      %v250 = vld [vmem:[#allocation14 + $0x3a0] sm:$0xff]
      %v251 = vld [vmem:[#allocation14 + $0x3a8] sm:$0xff]
      %v252 = vld [vmem:[#allocation14 + $0x3b0] sm:$0xff]
      %v253 = vld [vmem:[#allocation14 + $0x3b8] sm:$0xff]
      %v254 = vld [vmem:[#allocation14 + $0x3c0] sm:$0xff]
      %v255 = vld [vmem:[#allocation14 + $0x3c8] sm:$0xff]
      %v256 = vld [vmem:[#allocation14 + $0x3d0] sm:$0xff]
      %v257 = vld [vmem:[#allocation14 + $0x3d8] sm:$0xff]
      %v258 = vld [vmem:[#allocation14 + $0x3e0] sm:$0xff]
      %v259 = vld [vmem:[#allocation14 + $0x3e8] sm:$0xff]
      %v260 = vld [vmem:[#allocation14 + $0x3f0] sm:$0xff]
      %v261 = vld [vmem:[#allocation14 + $0x3f8] sm:$0xff]
      %v262 = vld [vmem:[#allocation14 + $0x400] sm:$0xff]
      %v263 = vld [vmem:[#allocation14 + $0x408] sm:$0xff]
      %v264 = vld [vmem:[#allocation14 + $0x410] sm:$0xff]
      %v265 = vld [vmem:[#allocation14 + $0x418] sm:$0xff]
      %v266 = vld [vmem:[#allocation14 + $0x420] sm:$0xff]
      %v267 = vld [vmem:[#allocation14 + $0x428] sm:$0xff]
      %v268 = vld [vmem:[#allocation14 + $0x430] sm:$0xff]
      %v269 = vld [vmem:[#allocation14 + $0x438] sm:$0xff]
      %v270 = vld [vmem:[#allocation14 + $0x440] sm:$0xff]
      %v271 = vld [vmem:[#allocation14 + $0x448] sm:$0xff]
      %v272 = vld [vmem:[#allocation14 + $0x450] sm:$0xff]
      %v273 = vld [vmem:[#allocation14 + $0x458] sm:$0xff]
      %v274 = vld [vmem:[#allocation14 + $0x460] sm:$0xff]
      %v275 = vld [vmem:[#allocation14 + $0x468] sm:$0xff]
      %v276 = vld [vmem:[#allocation14 + $0x470] sm:$0xff]
      %v277 = vld [vmem:[#allocation14 + $0x478] sm:$0xff]
      %v278 = vld [vmem:[%s5] sm:$0x7]
      %v280 = vperm.slane %v278, 0
      %v281 = vperm.slane %v278, 1
      %v282 = vperm.slane %v278, 2
      %286 = vmatpush.msra.mxu0 %v179
      %287 = vmatpush.msra.mxu0 %v176
      %288 = vmatpush.msra.mxu0 %v173
      %289 = vmatpush.msra.mxu0 %v170
      %290 = vmatpush.msra.mxu0 %v167
      %291 = vmatpush.msra.mxu0 %v164
      %292 = vmatpush.msra.mxu0 %v161
      %293 = vmatpush.msra.mxu0 %v158
      %294 = vmatpush.msra.mxu0 %v155
      %295 = vmatpush.msra.mxu0 %v152
      %296 = vmatpush.msra.mxu0 %v149
      %297 = vmatpush.msra.mxu0 %v146
      %298 = vmatpush.msra.mxu0 %v143
      %299 = vmatpush.msra.mxu0 %v140
      %300 = vmatpush.msra.mxu0 %v137
      %301 = vmatpush.msra.mxu0 %v134
      %302 = vmatmul.f32.gmra.mxu0 %v128
      %v303 = vpop.f32.mrf.mxu0
      %v304 = vadd.f32 %v280, %v303
      %305 = vmatmul.f32.gmra.mxu0 %v131
      %v306 = vpop.f32.mrf.mxu0
      %v307 = vadd.f32 %v280, %v306
      %308 = vdwg.mxu0
      %309 = vmatpush.msra.mxu0 %v227
      %310 = vmatpush.msra.mxu0 %v224
      %311 = vmatpush.msra.mxu0 %v221
      %312 = vmatpush.msra.mxu0 %v218
      %313 = vmatpush.msra.mxu0 %v215
      %314 = vmatpush.msra.mxu0 %v212
      %315 = vmatpush.msra.mxu0 %v209
      %316 = vmatpush.msra.mxu0 %v206
      %317 = vmatpush.msra.mxu0 %v203
      %318 = vmatpush.msra.mxu0 %v200
      %319 = vmatpush.msra.mxu0 %v197
      %320 = vmatpush.msra.mxu0 %v194
      %321 = vmatpush.msra.mxu0 %v191
      %322 = vmatpush.msra.mxu0 %v188
      %323 = vmatpush.msra.mxu0 %v185
      %324 = vmatpush.msra.mxu0 %v182
      %325 = vmatmul.f32.gmra.mxu0 %v129
      %v326 = vpop.f32.mrf.mxu0
      %v327 = vadd.f32 %v304, %v326
      %328 = vmatmul.f32.gmra.mxu0 %v132
      %v329 = vpop.f32.mrf.mxu0
      %v330 = vadd.f32 %v307, %v329
      %331 = vdwg.mxu0
      %332 = vmatpush.msra.mxu0 %v275
      %333 = vmatpush.msra.mxu0 %v272
      %334 = vmatpush.msra.mxu0 %v269
      %335 = vmatpush.msra.mxu0 %v266
      %336 = vmatpush.msra.mxu0 %v263
      %337 = vmatpush.msra.mxu0 %v260
      %338 = vmatpush.msra.mxu0 %v257
      %339 = vmatpush.msra.mxu0 %v254
      %340 = vmatpush.msra.mxu0 %v251
      %341 = vmatpush.msra.mxu0 %v248
      %342 = vmatpush.msra.mxu0 %v245
      %343 = vmatpush.msra.mxu0 %v242
      %344 = vmatpush.msra.mxu0 %v239
      %345 = vmatpush.msra.mxu0 %v236
      %346 = vmatpush.msra.mxu0 %v233
      %347 = vmatpush.msra.mxu0 %v230
      %348 = vmatmul.f32.gmra.mxu0 %v130
      %v349 = vpop.f32.mrf.mxu0
      %v350 = vadd.f32 %v327, %v349
      %351 = vmatmul.f32.gmra.mxu0 %v133
      %v352 = vpop.f32.mrf.mxu0
      %v353 = vadd.f32 %v330, %v352
      %354 = vdwg.mxu0
      %355 = vmatpush.msra.mxu0 %v180
      %356 = vmatpush.msra.mxu0 %v177
      %357 = vmatpush.msra.mxu0 %v174
      %358 = vmatpush.msra.mxu0 %v171
      %359 = vmatpush.msra.mxu0 %v168
      %360 = vmatpush.msra.mxu0 %v165
      %361 = vmatpush.msra.mxu0 %v162
      %362 = vmatpush.msra.mxu0 %v159
      %363 = vmatpush.msra.mxu0 %v156
      %364 = vmatpush.msra.mxu0 %v153
      %365 = vmatpush.msra.mxu0 %v150
      %366 = vmatpush.msra.mxu0 %v147
      %367 = vmatpush.msra.mxu0 %v144
      %368 = vmatpush.msra.mxu0 %v141
      %369 = vmatpush.msra.mxu0 %v138
      %370 = vmatpush.msra.mxu0 %v135
      %371 = vmatmul.f32.gmra.mxu0 %v128
      %v372 = vpop.f32.mrf.mxu0
      %v373 = vadd.f32 %v281, %v372
      %374 = vmatmul.f32.gmra.mxu0 %v131
      %v375 = vpop.f32.mrf.mxu0
      %v376 = vadd.f32 %v281, %v375
      %377 = vdwg.mxu0
      %378 = vmatpush.msra.mxu0 %v228
      %379 = vmatpush.msra.mxu0 %v225
      %380 = vmatpush.msra.mxu0 %v222
      %381 = vmatpush.msra.mxu0 %v219
      %382 = vmatpush.msra.mxu0 %v216
      %383 = vmatpush.msra.mxu0 %v213
      %384 = vmatpush.msra.mxu0 %v210
      %385 = vmatpush.msra.mxu0 %v207
      %386 = vmatpush.msra.mxu0 %v204
      %387 = vmatpush.msra.mxu0 %v201
      %388 = vmatpush.msra.mxu0 %v198
      %389 = vmatpush.msra.mxu0 %v195
      %390 = vmatpush.msra.mxu0 %v192
      %391 = vmatpush.msra.mxu0 %v189
      %392 = vmatpush.msra.mxu0 %v186
      %393 = vmatpush.msra.mxu0 %v183
      %394 = vmatmul.f32.gmra.mxu0 %v129
      %v395 = vpop.f32.mrf.mxu0
      %v396 = vadd.f32 %v373, %v395
      %397 = vmatmul.f32.gmra.mxu0 %v132
      %v398 = vpop.f32.mrf.mxu0
      %v399 = vadd.f32 %v376, %v398
      %400 = vdwg.mxu0
      %401 = vmatpush.msra.mxu0 %v276
      %402 = vmatpush.msra.mxu0 %v273
      %403 = vmatpush.msra.mxu0 %v270
      %404 = vmatpush.msra.mxu0 %v267
      %405 = vmatpush.msra.mxu0 %v264
      %406 = vmatpush.msra.mxu0 %v261
      %407 = vmatpush.msra.mxu0 %v258
      %408 = vmatpush.msra.mxu0 %v255
      %409 = vmatpush.msra.mxu0 %v252
      %410 = vmatpush.msra.mxu0 %v249
      %411 = vmatpush.msra.mxu0 %v246
      %412 = vmatpush.msra.mxu0 %v243
      %413 = vmatpush.msra.mxu0 %v240
      %414 = vmatpush.msra.mxu0 %v237
      %415 = vmatpush.msra.mxu0 %v234
      %416 = vmatpush.msra.mxu0 %v231
      %417 = vmatmul.f32.gmra.mxu0 %v130
      %v418 = vpop.f32.mrf.mxu0
      %v419 = vadd.f32 %v396, %v418
      %420 = vmatmul.f32.gmra.mxu0 %v133
      %v421 = vpop.f32.mrf.mxu0
      %v422 = vadd.f32 %v399, %v421
      %423 = vdwg.mxu0
      %424 = vmatpush.msra.mxu0 %v181
      %425 = vmatpush.msra.mxu0 %v178
      %426 = vmatpush.msra.mxu0 %v175
      %427 = vmatpush.msra.mxu0 %v172
      %428 = vmatpush.msra.mxu0 %v169
      %429 = vmatpush.msra.mxu0 %v166
      %430 = vmatpush.msra.mxu0 %v163
      %431 = vmatpush.msra.mxu0 %v160
      %432 = vmatpush.msra.mxu0 %v157
      %433 = vmatpush.msra.mxu0 %v154
      %434 = vmatpush.msra.mxu0 %v151
      %435 = vmatpush.msra.mxu0 %v148
      %436 = vmatpush.msra.mxu0 %v145
      %437 = vmatpush.msra.mxu0 %v142
      %438 = vmatpush.msra.mxu0 %v139
      %439 = vmatpush.msra.mxu0 %v136
      %440 = vmatmul.f32.gmra.mxu0 %v128
      %v441 = vpop.f32.mrf.mxu0
      %v442 = vadd.f32 %v282, %v441
      %443 = vmatmul.f32.gmra.mxu0 %v131
      %v444 = vpop.f32.mrf.mxu0
      %v445 = vadd.f32 %v282, %v444
      %446 = vdwg.mxu0
      %447 = vmatpush.msra.mxu0 %v229
      %448 = vmatpush.msra.mxu0 %v226
      %449 = vmatpush.msra.mxu0 %v223
      %450 = vmatpush.msra.mxu0 %v220
      %451 = vmatpush.msra.mxu0 %v217
      %452 = vmatpush.msra.mxu0 %v214
      %453 = vmatpush.msra.mxu0 %v211
      %454 = vmatpush.msra.mxu0 %v208
      %455 = vmatpush.msra.mxu0 %v205
      %456 = vmatpush.msra.mxu0 %v202
      %457 = vmatpush.msra.mxu0 %v199
      %458 = vmatpush.msra.mxu0 %v196
      %459 = vmatpush.msra.mxu0 %v193
      %460 = vmatpush.msra.mxu0 %v190
      %461 = vmatpush.msra.mxu0 %v187
      %462 = vmatpush.msra.mxu0 %v184
      %463 = vmatmul.f32.gmra.mxu0 %v129
      %v464 = vpop.f32.mrf.mxu0
      %v465 = vadd.f32 %v442, %v464
      %466 = vmatmul.f32.gmra.mxu0 %v132
      %v467 = vpop.f32.mrf.mxu0
      %v468 = vadd.f32 %v445, %v467
      %469 = vdwg.mxu0
      %470 = vmatpush.msra.mxu0 %v277
      %471 = vmatpush.msra.mxu0 %v274
      %472 = vmatpush.msra.mxu0 %v271
      %473 = vmatpush.msra.mxu0 %v268
      %474 = vmatpush.msra.mxu0 %v265
      %475 = vmatpush.msra.mxu0 %v262
      %476 = vmatpush.msra.mxu0 %v259
      %477 = vmatpush.msra.mxu0 %v256
      %478 = vmatpush.msra.mxu0 %v253
      %479 = vmatpush.msra.mxu0 %v250
      %480 = vmatpush.msra.mxu0 %v247
      %481 = vmatpush.msra.mxu0 %v244
      %482 = vmatpush.msra.mxu0 %v241
      %483 = vmatpush.msra.mxu0 %v238
      %484 = vmatpush.msra.mxu0 %v235
      %485 = vmatpush.msra.mxu0 %v232
      %486 = vmatmul.f32.gmra.mxu0 %v130
      %v487 = vpop.f32.mrf.mxu0
      %v488 = vadd.f32 %v465, %v487
      %489 = vmatmul.f32.gmra.mxu0 %v133
      %v490 = vpop.f32.mrf.mxu0
      %v491 = vadd.f32 %v468, %v490
      %492 = vdwg.mxu0
      %vm493 = vcmp.ge.f32.partialorder %v350, 0.0
      %vm494 = vcmp.ge.f32.partialorder %v419, 0.0
      %vm495 = vcmp.ge.f32.partialorder %v488, 0.0
      %vm496 = vcmp.ge.f32.partialorder %v353, 0.0
      %vm497 = vcmp.ge.f32.partialorder %v422, 0.0
      %vm498 = vcmp.ge.f32.partialorder %v491, 0.0
      %v499 = vmul.f32 %v350, 0.2
      %v500 = vmul.f32 %v419, 0.2
      %v501 = vmul.f32 %v488, 0.2
      %v502 = vmul.f32 %v353, 0.2
      %v503 = vmul.f32 %v422, 0.2
      %v504 = vmul.f32 %v491, 0.2
      %v505 = vsel %vm493, %v350, %v499
      %v506 = vsel %vm494, %v419, %v500
      %v507 = vsel %vm495, %v488, %v501
      %v508 = vsel %vm496, %v353, %v502
      %v509 = vsel %vm497, %v422, %v503
      %v510 = vsel %vm498, %v491, %v504
      %511 = vst [vmem:[#allocation2] sm:$0xff] %v505
      %512 = vst [vmem:[#allocation2 + $0x8] sm:$0xff] %v506
      %513 = vst [vmem:[#allocation2 + $0x10] sm:$0xff] %v507
      %514 = vst [vmem:[#allocation2 + $0x18] sm:$0xff] %v508
      %515 = vst [vmem:[#allocation2 + $0x20] sm:$0xff] %v509
      %516 = vst [vmem:[#allocation2 + $0x28] sm:$0xff] %v510
      %517 = vst [vmem:[#allocation3] sm:$0xff] -1e+30
      %518 = vst [vmem:[#allocation3 + $0x8] sm:$0xff] -1e+30
      %519 = vst [vmem:[#allocation3 + $0x10] sm:$0xff] -1e+30
      %520 = vst [vmem:[#allocation3 + $0x18] sm:$0xff] -1e+30
      %521 = vst [vmem:[#allocation3 + $0x20] sm:$0xff] -1e+30
      %522 = vst [vmem:[#allocation3 + $0x28] sm:$0xff] -1e+30
      %523 = vst [vmem:[#allocation4] sm:$0xff] 0.0
      %524 = vst [vmem:[#allocation4 + $0x8] sm:$0xff] 0.0
      %525 = vst [vmem:[#allocation4 + $0x10] sm:$0xff] 0.0
      %526 = vst [vmem:[#allocation4 + $0x18] sm:$0xff] 0.0
      %527 = vst [vmem:[#allocation4 + $0x20] sm:$0xff] 0.0
      %528 = vst [vmem:[#allocation4 + $0x28] sm:$0xff] 0.0
      %529 = vst [vmem:[#allocation5] sm:$0xff] 0.0
      %530 = vst [vmem:[#allocation5 + $0x8] sm:$0xff] 0.0
      %531 = vst [vmem:[#allocation5 + $0x10] sm:$0xff] 0.0
      %532 = vst [vmem:[#allocation5 + $0x18] sm:$0xff] 0.0
      %533 = vst [vmem:[#allocation5 + $0x20] sm:$0xff] 0.0
      %534 = vst [vmem:[#allocation5 + $0x28] sm:$0xff] 0.0
    $region61: #{tpu_custom_call.1} parent=1 // pred_fallthru
      _
    %v535 = vld [vmem:[#allocation11] sm:$0xff]
    %v536 = vld [vmem:[#allocation11 + $0x8] sm:$0xff]
    %v537 = vld [vmem:[#allocation11 + $0x10] sm:$0xff]
    %v538 = vld [vmem:[#allocation11 + $0x18] sm:$0xff]
    %v539 = vld [vmem:[#allocation11 + $0x20] sm:$0xff]
    %v540 = vld [vmem:[#allocation11 + $0x28] sm:$0xff]
    %v541 = vld [vmem:[#allocation11 + $0x30] sm:$0xff]
    %v542 = vld [vmem:[#allocation11 + $0x38] sm:$0xff]
    %v543 = vld [vmem:[#allocation11 + $0x40] sm:$0xff]
    %v544 = vld [vmem:[#allocation11 + $0x48] sm:$0xff]
    %v545 = vld [vmem:[#allocation11 + $0x50] sm:$0xff]
    %v546 = vld [vmem:[#allocation11 + $0x58] sm:$0xff]
    %v547 = vld [vmem:[#allocation11 + $0x60] sm:$0xff]
    %v548 = vld [vmem:[#allocation11 + $0x68] sm:$0xff]
    %v549 = vld [vmem:[#allocation11 + $0x70] sm:$0xff]
    %v550 = vld [vmem:[#allocation11 + $0x78] sm:$0xff]
    %v551 = vld [vmem:[#allocation11 + $0x80] sm:$0xff]
    %v552 = vld [vmem:[#allocation11 + $0x88] sm:$0xff]
    %v553 = vld [vmem:[#allocation11 + $0x90] sm:$0xff]
    %v554 = vld [vmem:[#allocation11 + $0x98] sm:$0xff]
    %v555 = vld [vmem:[#allocation11 + $0xa0] sm:$0xff]
    %v556 = vld [vmem:[#allocation11 + $0xa8] sm:$0xff]
    %v557 = vld [vmem:[#allocation11 + $0xb0] sm:$0xff]
    %v558 = vld [vmem:[#allocation11 + $0xb8] sm:$0xff]
    %v559 = vld [vmem:[#allocation11 + $0xc0] sm:$0xff]
    %v560 = vld [vmem:[#allocation11 + $0xc8] sm:$0xff]
    %v561 = vld [vmem:[#allocation11 + $0xd0] sm:$0xff]
    %v562 = vld [vmem:[#allocation11 + $0xd8] sm:$0xff]
    %v563 = vld [vmem:[#allocation11 + $0xe0] sm:$0xff]
    %v564 = vld [vmem:[#allocation11 + $0xe8] sm:$0xff]
    %v565 = vld [vmem:[#allocation11 + $0xf0] sm:$0xff]
    %v566 = vld [vmem:[#allocation11 + $0xf8] sm:$0xff]
    %v567 = vld [vmem:[#allocation11 + $0x100] sm:$0xff]
    %v568 = vld [vmem:[#allocation11 + $0x108] sm:$0xff]
    %v569 = vld [vmem:[#allocation11 + $0x110] sm:$0xff]
    %v570 = vld [vmem:[#allocation11 + $0x118] sm:$0xff]
    %v571 = vld [vmem:[#allocation11 + $0x120] sm:$0xff]
    %v572 = vld [vmem:[#allocation11 + $0x128] sm:$0xff]
    %v573 = vld [vmem:[#allocation11 + $0x130] sm:$0xff]
    %v574 = vld [vmem:[#allocation11 + $0x138] sm:$0xff]
    %v575 = vld [vmem:[#allocation11 + $0x140] sm:$0xff]
    %v576 = vld [vmem:[#allocation11 + $0x148] sm:$0xff]
    %v577 = vld [vmem:[#allocation11 + $0x150] sm:$0xff]
    %v578 = vld [vmem:[#allocation11 + $0x158] sm:$0xff]
    %v579 = vld [vmem:[#allocation11 + $0x160] sm:$0xff]
    %v580 = vld [vmem:[#allocation11 + $0x168] sm:$0xff]
    %v581 = vld [vmem:[#allocation11 + $0x170] sm:$0xff]
    %v582 = vld [vmem:[#allocation11 + $0x178] sm:$0xff]
    %v583 = vld [vmem:[#allocation12] sm:$0xf]
    %v584 = vld [vmem:[#allocation12 + $0x4] sm:$0xf]
    %v585 = vunpack.c.l.bf16 %v583
    %v586 = vunpack.c.l.bf16 %v584
    %v587 = vld [vmem:[#allocation2] sm:$0xff]
    %v588 = vld [vmem:[#allocation2 + $0x8] sm:$0xff]
    %v589 = vld [vmem:[#allocation2 + $0x10] sm:$0xff]
    %v590 = vld [vmem:[#allocation2 + $0x18] sm:$0xff]
    %v591 = vld [vmem:[#allocation2 + $0x20] sm:$0xff]
    %v592 = vld [vmem:[#allocation2 + $0x28] sm:$0xff]
    %593 = vmatpush.xpose.msra.mxu0 %v580
    %594 = vmatpush.xpose.msra.mxu0 %v577
    %595 = vmatpush.xpose.msra.mxu0 %v574
    %596 = vmatpush.xpose.msra.mxu0 %v571
    %597 = vmatpush.xpose.msra.mxu0 %v568
    %598 = vmatpush.xpose.msra.mxu0 %v565
    %599 = vmatpush.xpose.msra.mxu0 %v562
    %600 = vmatpush.xpose.msra.mxu0 %v559
    %601 = vmatpush.xpose.msra.mxu0 %v556
    %602 = vmatpush.xpose.msra.mxu0 %v553
    %603 = vmatpush.xpose.msra.mxu0 %v550
    %604 = vmatpush.xpose.msra.mxu0 %v547
    %605 = vmatpush.xpose.msra.mxu0 %v544
    %606 = vmatpush.xpose.msra.mxu0 %v541
    %607 = vmatpush.xpose.msra.mxu0 %v538
    %608 = vmatpush.xpose.msra.mxu0 %v535
    %609 = vmatmul.f32.gmra.mxu0 %v587
    %v610 = vpop.f32.mrf.mxu0
    %v611 = vadd.f32 %v585, %v610
    %612 = vmatmul.f32.gmra.mxu0 %v590
    %v613 = vpop.f32.mrf.mxu0
    %v614 = vadd.f32 %v586, %v613
    %615 = vdwg.mxu0
    %v616 = vld [vmem:[#allocation3] sm:$0xff]
    %v617 = vld [vmem:[#allocation3 + $0x18] sm:$0xff]
    %618 = vmax.xlane.f32.xlu0 %v611
    %v619 = vpop.xlane.xlu0 %618
    %620 = vmax.xlane.f32.xlu0 %v614
    %v621 = vpop.xlane.xlu0 %620
    %v622 = vmax.f32 %v616, %v619
    %v623 = vmax.f32 %v617, %v621
    %v624 = vsub.f32 %v616, %v622
    %v625 = vsub.f32 %v617, %v623
    %v626 = vmul.f32 %v624, 1.442695
    %v627 = vpow.pop %v626
    %v628 = vmul.f32 %v625, 1.442695
    %v629 = vpow.pop %v628
    %631 = vset.pattern.permute.xlu0 0
    %632 = vperm.xlu0 %631, %v622
    %v633 = vpop.permute.xlu0 %632
    %636 = vset.pattern.permute.xlu0 0
    %637 = vperm.xlu0 %636, %v623
    %v638 = vpop.permute.xlu0 %637
    %v640 = vsub.f32 %v611, %v633
    %v641 = vsub.f32 %v614, %v638
    %v642 = vmul.f32 %v640, 1.442695
    %v643 = vpow.pop %v642
    %v644 = vmul.f32 %v641, 1.442695
    %v645 = vpow.pop %v644
    %v646 = vld [vmem:[#allocation4] sm:$0xff]
    %v647 = vld [vmem:[#allocation4 + $0x18] sm:$0xff]
    %v648 = vmul.f32 %v627, %v646
    %v649 = vmul.f32 %v629, %v647
    %650 = vadd.xlane.f32.xlu0 %v643
    %v651 = vpop.xlane.xlu0 %650
    %652 = vadd.xlane.f32.xlu0 %v645
    %v653 = vpop.xlane.xlu0 %652
    %v654 = vadd.f32 %v648, %v651
    %v655 = vadd.f32 %v649, %v653
    %656 = vst [vmem:[#allocation4] sm:$0xff] %v654
    %657 = vst [vmem:[#allocation4 + $0x18] sm:$0xff] %v655
    %v658 = vld [vmem:[#allocation5] sm:$0xff]
    %v659 = vld [vmem:[#allocation5 + $0x18] sm:$0xff]
    %v660 = vmul.f32 %v627, %v658
    %v661 = vmul.f32 %v629, %v659
    %662 = vmatpush.msra.mxu0 %v580
    %663 = vmatpush.msra.mxu0 %v577
    %664 = vmatpush.msra.mxu0 %v574
    %665 = vmatpush.msra.mxu0 %v571
    %666 = vmatpush.msra.mxu0 %v568
    %667 = vmatpush.msra.mxu0 %v565
    %668 = vmatpush.msra.mxu0 %v562
    %669 = vmatpush.msra.mxu0 %v559
    %670 = vmatpush.msra.mxu0 %v556
    %671 = vmatpush.msra.mxu0 %v553
    %672 = vmatpush.msra.mxu0 %v550
    %673 = vmatpush.msra.mxu0 %v547
    %674 = vmatpush.msra.mxu0 %v544
    %675 = vmatpush.msra.mxu0 %v541
    %676 = vmatpush.msra.mxu0 %v538
    %677 = vmatpush.msra.mxu0 %v535
    %678 = vmatmul.f32.gmra.mxu0 %v643
    %v679 = vpop.f32.mrf.mxu0
    %v680 = vadd.f32 0.0, %v679
    %681 = vmatmul.f32.gmra.mxu0 %v645
    %v682 = vpop.f32.mrf.mxu0
    %v683 = vadd.f32 0.0, %v682
    %684 = vdwg.mxu0
    %v685 = vadd.f32 %v660, %v680
    %v686 = vadd.f32 %v661, %v683
    %687 = vst [vmem:[#allocation5] sm:$0xff] %v685
    %688 = vst [vmem:[#allocation5 + $0x18] sm:$0xff] %v686
    %689 = vst [vmem:[#allocation3] sm:$0xff] %v622
    %690 = vst [vmem:[#allocation3 + $0x18] sm:$0xff] %v623
    %691 = vmatpush.xpose.msra.mxu0 %v581
    %692 = vmatpush.xpose.msra.mxu0 %v578
    %693 = vmatpush.xpose.msra.mxu0 %v575
    %694 = vmatpush.xpose.msra.mxu0 %v572
    %695 = vmatpush.xpose.msra.mxu0 %v569
    %696 = vmatpush.xpose.msra.mxu0 %v566
    %697 = vmatpush.xpose.msra.mxu0 %v563
    %698 = vmatpush.xpose.msra.mxu0 %v560
    %699 = vmatpush.xpose.msra.mxu0 %v557
    %700 = vmatpush.xpose.msra.mxu0 %v554
    %701 = vmatpush.xpose.msra.mxu0 %v551
    %702 = vmatpush.xpose.msra.mxu0 %v548
    %703 = vmatpush.xpose.msra.mxu0 %v545
    %704 = vmatpush.xpose.msra.mxu0 %v542
    %705 = vmatpush.xpose.msra.mxu0 %v539
    %706 = vmatpush.xpose.msra.mxu0 %v536
    %707 = vmatmul.f32.gmra.mxu0 %v588
    %v708 = vpop.f32.mrf.mxu0
    %v709 = vadd.f32 %v585, %v708
    %710 = vmatmul.f32.gmra.mxu0 %v591
    %v711 = vpop.f32.mrf.mxu0
    %v712 = vadd.f32 %v586, %v711
    %713 = vdwg.mxu0
    %v714 = vld [vmem:[#allocation3 + $0x8] sm:$0xff]
    %v715 = vld [vmem:[#allocation3 + $0x20] sm:$0xff]
    %716 = vmax.xlane.f32.xlu0 %v709
    %v717 = vpop.xlane.xlu0 %716
    %718 = vmax.xlane.f32.xlu0 %v712
    %v719 = vpop.xlane.xlu0 %718
    %v720 = vmax.f32 %v714, %v717
    %v721 = vmax.f32 %v715, %v719
    %v722 = vsub.f32 %v714, %v720
    %v723 = vsub.f32 %v715, %v721
    %v724 = vmul.f32 %v722, 1.442695
    %v725 = vpow.pop %v724
    %v726 = vmul.f32 %v723, 1.442695
    %v727 = vpow.pop %v726
    %729 = vset.pattern.permute.xlu0 0
    %730 = vperm.xlu0 %729, %v720
    %v731 = vpop.permute.xlu0 %730
    %734 = vset.pattern.permute.xlu0 0
    %735 = vperm.xlu0 %734, %v721
    %v736 = vpop.permute.xlu0 %735
    %v738 = vsub.f32 %v709, %v731
    %v739 = vsub.f32 %v712, %v736
    %v740 = vmul.f32 %v738, 1.442695
    %v741 = vpow.pop %v740
    %v742 = vmul.f32 %v739, 1.442695
    %v743 = vpow.pop %v742
    %v744 = vld [vmem:[#allocation4 + $0x8] sm:$0xff]
    %v745 = vld [vmem:[#allocation4 + $0x20] sm:$0xff]
    %v746 = vmul.f32 %v725, %v744
    %v747 = vmul.f32 %v727, %v745
    %748 = vadd.xlane.f32.xlu0 %v741
    %v749 = vpop.xlane.xlu0 %748
    %750 = vadd.xlane.f32.xlu0 %v743
    %v751 = vpop.xlane.xlu0 %750
    %v752 = vadd.f32 %v746, %v749
    %v753 = vadd.f32 %v747, %v751
    %754 = vst [vmem:[#allocation4 + $0x8] sm:$0xff] %v752
    %755 = vst [vmem:[#allocation4 + $0x20] sm:$0xff] %v753
    %v756 = vld [vmem:[#allocation5 + $0x8] sm:$0xff]
    %v757 = vld [vmem:[#allocation5 + $0x20] sm:$0xff]
    %v758 = vmul.f32 %v725, %v756
    %v759 = vmul.f32 %v727, %v757
    %760 = vmatpush.msra.mxu0 %v581
    %761 = vmatpush.msra.mxu0 %v578
    %762 = vmatpush.msra.mxu0 %v575
    %763 = vmatpush.msra.mxu0 %v572
    %764 = vmatpush.msra.mxu0 %v569
    %765 = vmatpush.msra.mxu0 %v566
    %766 = vmatpush.msra.mxu0 %v563
    %767 = vmatpush.msra.mxu0 %v560
    %768 = vmatpush.msra.mxu0 %v557
    %769 = vmatpush.msra.mxu0 %v554
    %770 = vmatpush.msra.mxu0 %v551
    %771 = vmatpush.msra.mxu0 %v548
    %772 = vmatpush.msra.mxu0 %v545
    %773 = vmatpush.msra.mxu0 %v542
    %774 = vmatpush.msra.mxu0 %v539
    %775 = vmatpush.msra.mxu0 %v536
    %776 = vmatmul.f32.gmra.mxu0 %v741
    %v777 = vpop.f32.mrf.mxu0
    %v778 = vadd.f32 0.0, %v777
    %779 = vmatmul.f32.gmra.mxu0 %v743
    %v780 = vpop.f32.mrf.mxu0
    %v781 = vadd.f32 0.0, %v780
    %782 = vdwg.mxu0
    %v783 = vadd.f32 %v758, %v778
    %v784 = vadd.f32 %v759, %v781
    %785 = vst [vmem:[#allocation5 + $0x8] sm:$0xff] %v783
    %786 = vst [vmem:[#allocation5 + $0x20] sm:$0xff] %v784
    %787 = vst [vmem:[#allocation3 + $0x8] sm:$0xff] %v720
    %788 = vst [vmem:[#allocation3 + $0x20] sm:$0xff] %v721
    %789 = vmatpush.xpose.msra.mxu0 %v582
    %790 = vmatpush.xpose.msra.mxu0 %v579
    %791 = vmatpush.xpose.msra.mxu0 %v576
    %792 = vmatpush.xpose.msra.mxu0 %v573
    %793 = vmatpush.xpose.msra.mxu0 %v570
    %794 = vmatpush.xpose.msra.mxu0 %v567
    %795 = vmatpush.xpose.msra.mxu0 %v564
    %796 = vmatpush.xpose.msra.mxu0 %v561
    %797 = vmatpush.xpose.msra.mxu0 %v558
    %798 = vmatpush.xpose.msra.mxu0 %v555
    %799 = vmatpush.xpose.msra.mxu0 %v552
    %800 = vmatpush.xpose.msra.mxu0 %v549
    %801 = vmatpush.xpose.msra.mxu0 %v546
    %802 = vmatpush.xpose.msra.mxu0 %v543
    %803 = vmatpush.xpose.msra.mxu0 %v540
    %804 = vmatpush.xpose.msra.mxu0 %v537
    %805 = vmatmul.f32.gmra.mxu0 %v589
    %v806 = vpop.f32.mrf.mxu0
    %v807 = vadd.f32 %v585, %v806
    %808 = vmatmul.f32.gmra.mxu0 %v592
    %v809 = vpop.f32.mrf.mxu0
    %v810 = vadd.f32 %v586, %v809
    %811 = vdwg.mxu0
    %v812 = vld [vmem:[#allocation3 + $0x10] sm:$0xff]
    %v813 = vld [vmem:[#allocation3 + $0x28] sm:$0xff]
    %814 = vmax.xlane.f32.xlu0 %v807
    %v815 = vpop.xlane.xlu0 %814
    %816 = vmax.xlane.f32.xlu0 %v810
    %v817 = vpop.xlane.xlu0 %816
    %v818 = vmax.f32 %v812, %v815
    %v819 = vmax.f32 %v813, %v817
    %v820 = vsub.f32 %v812, %v818
    %v821 = vsub.f32 %v813, %v819
    %v822 = vmul.f32 %v820, 1.442695
    %v823 = vpow.pop %v822
    %v824 = vmul.f32 %v821, 1.442695
    %v825 = vpow.pop %v824
    %827 = vset.pattern.permute.xlu0 0
    %828 = vperm.xlu0 %827, %v818
    %v829 = vpop.permute.xlu0 %828
    %832 = vset.pattern.permute.xlu0 0
    %833 = vperm.xlu0 %832, %v819
    %v834 = vpop.permute.xlu0 %833
    %v836 = vsub.f32 %v807, %v829
    %v837 = vsub.f32 %v810, %v834
    %v838 = vmul.f32 %v836, 1.442695
    %v839 = vpow.pop %v838
    %v840 = vmul.f32 %v837, 1.442695
    %v841 = vpow.pop %v840
    %v842 = vld [vmem:[#allocation4 + $0x10] sm:$0xff]
    %v843 = vld [vmem:[#allocation4 + $0x28] sm:$0xff]
    %v844 = vmul.f32 %v823, %v842
    %v845 = vmul.f32 %v825, %v843
    %846 = vadd.xlane.f32.xlu0 %v839
    %v847 = vpop.xlane.xlu0 %846
    %848 = vadd.xlane.f32.xlu0 %v841
    %v849 = vpop.xlane.xlu0 %848
    %v850 = vadd.f32 %v844, %v847
    %v851 = vadd.f32 %v845, %v849
    %852 = vst [vmem:[#allocation4 + $0x10] sm:$0xff] %v850
    %853 = vst [vmem:[#allocation4 + $0x28] sm:$0xff] %v851
    %v854 = vld [vmem:[#allocation5 + $0x10] sm:$0xff]
    %v855 = vld [vmem:[#allocation5 + $0x28] sm:$0xff]
    %v856 = vmul.f32 %v823, %v854
    %v857 = vmul.f32 %v825, %v855
    %858 = vmatpush.msra.mxu0 %v582
    %859 = vmatpush.msra.mxu0 %v579
    %860 = vmatpush.msra.mxu0 %v576
    %861 = vmatpush.msra.mxu0 %v573
    %862 = vmatpush.msra.mxu0 %v570
    %863 = vmatpush.msra.mxu0 %v567
    %864 = vmatpush.msra.mxu0 %v564
    %865 = vmatpush.msra.mxu0 %v561
    %866 = vmatpush.msra.mxu0 %v558
    %867 = vmatpush.msra.mxu0 %v555
    %868 = vmatpush.msra.mxu0 %v552
    %869 = vmatpush.msra.mxu0 %v549
    %870 = vmatpush.msra.mxu0 %v546
    %871 = vmatpush.msra.mxu0 %v543
    %872 = vmatpush.msra.mxu0 %v540
    %873 = vmatpush.msra.mxu0 %v537
    %874 = vmatmul.f32.gmra.mxu0 %v839
    %v875 = vpop.f32.mrf.mxu0
    %v876 = vadd.f32 0.0, %v875
    %877 = vmatmul.f32.gmra.mxu0 %v841
    %v878 = vpop.f32.mrf.mxu0
    %v879 = vadd.f32 0.0, %v878
    %880 = vdwg.mxu0
    %v881 = vadd.f32 %v856, %v876
    %v882 = vadd.f32 %v857, %v879
    %883 = vst [vmem:[#allocation5 + $0x10] sm:$0xff] %v881
    %884 = vst [vmem:[#allocation5 + $0x28] sm:$0xff] %v882
    %885 = vst [vmem:[#allocation3 + $0x10] sm:$0xff] %v818
    %886 = vst [vmem:[#allocation3 + $0x28] sm:$0xff] %v819
    // Predicated region
    $region62: #{tpu_custom_call.1} parent=1 // pred_check
      %p887 = pneg %p124
    $region63: #{tpu_custom_call.1} parent=1 // pred_check_branch
      %889 = sbr.rel (%p887) target = $region65
    $region64: #{tpu_custom_call.1} parent=1 // pred_region
      %v890 = vld [vmem:[#allocation6] sm:$0xff]
      %v891 = vld [vmem:[#allocation6 + $0x8] sm:$0xff]
      %v892 = vld [vmem:[#allocation6 + $0x10] sm:$0xff]
      %v893 = vld [vmem:[#allocation6 + $0x18] sm:$0xff]
      %v894 = vld [vmem:[#allocation6 + $0x20] sm:$0xff]
      %v895 = vld [vmem:[#allocation6 + $0x28] sm:$0xff]
      %v896 = vld [vmem:[#allocation5] sm:$0xff]
      %v897 = vld [vmem:[#allocation5 + $0x18] sm:$0xff]
      %v898 = vld [vmem:[#allocation4] sm:$0xff]
      %v899 = vld [vmem:[#allocation4 + $0x18] sm:$0xff]
      %v900 = vrcp.pop %v898
      %v901 = vmul.f32 %v898, %v900
      %v902 = vsub.f32 1.0, %v901
      %v903 = vmul.f32 %v900, %v902
      %v904 = vadd.f32 %v900, %v903
      %vm905 = vweird.f32 %v898
      %vm906 = vweird.f32 %v900
      %vm907 = vmor %vm905, %vm906
      %v908 = vsel %vm907, %v900, %v904
      %v909 = vand.u32 2147483647, %v898
      %vm910 = vcmp.eq.f32.partialorder %v909, 8.507059e+37
      %v911 = vand.u32 %v898, 2147483648
      %v912 = vor.u32 1.1754944e-38, %v911
      %v913 = vsel %vm910, %v912, %v908
      %v914 = vmul.f32 %v896, %v913
      %v915 = vrcp.pop %v899
      %v916 = vmul.f32 %v899, %v915
      %v917 = vsub.f32 1.0, %v916
      %v918 = vmul.f32 %v915, %v917
      %v919 = vadd.f32 %v915, %v918
      %vm920 = vweird.f32 %v899
      %vm921 = vweird.f32 %v915
      %vm922 = vmor %vm920, %vm921
      %v923 = vsel %vm922, %v915, %v919
      %v924 = vand.u32 2147483647, %v899
      %vm925 = vcmp.eq.f32.partialorder %v924, 8.507059e+37
      %v926 = vand.u32 %v899, 2147483648
      %v927 = vor.u32 1.1754944e-38, %v926
      %v928 = vsel %vm925, %v927, %v923
      %v929 = vmul.f32 %v897, %v928
      %v930 = vadd.f32 %v890, %v914
      %v931 = vadd.f32 %v893, %v929
      %932 = vst [vmem:[#allocation5] sm:$0xff] %v930
      %933 = vst [vmem:[#allocation5 + $0x18] sm:$0xff] %v931
      %v934 = vld [vmem:[#allocation5 + $0x8] sm:$0xff]
      %v935 = vld [vmem:[#allocation5 + $0x20] sm:$0xff]
      %v936 = vld [vmem:[#allocation4 + $0x8] sm:$0xff]
      %v937 = vld [vmem:[#allocation4 + $0x20] sm:$0xff]
      %v938 = vrcp.pop %v936
      %v939 = vmul.f32 %v936, %v938
      %v940 = vsub.f32 1.0, %v939
      %v941 = vmul.f32 %v938, %v940
      %v942 = vadd.f32 %v938, %v941
      %vm943 = vweird.f32 %v936
      %vm944 = vweird.f32 %v938
      %vm945 = vmor %vm943, %vm944
      %v946 = vsel %vm945, %v938, %v942
      %v947 = vand.u32 2147483647, %v936
      %vm948 = vcmp.eq.f32.partialorder %v947, 8.507059e+37
      %v949 = vand.u32 %v936, 2147483648
      %v950 = vor.u32 1.1754944e-38, %v949
      %v951 = vsel %vm948, %v950, %v946
      %v952 = vmul.f32 %v934, %v951
      %v953 = vrcp.pop %v937
      %v954 = vmul.f32 %v937, %v953
      %v955 = vsub.f32 1.0, %v954
      %v956 = vmul.f32 %v953, %v955
      %v957 = vadd.f32 %v953, %v956
      %vm958 = vweird.f32 %v937
      %vm959 = vweird.f32 %v953
      %vm960 = vmor %vm958, %vm959
      %v961 = vsel %vm960, %v953, %v957
      %v962 = vand.u32 2147483647, %v937
      %vm963 = vcmp.eq.f32.partialorder %v962, 8.507059e+37
      %v964 = vand.u32 %v937, 2147483648
      %v965 = vor.u32 1.1754944e-38, %v964
      %v966 = vsel %vm963, %v965, %v961
      %v967 = vmul.f32 %v935, %v966
      %v968 = vadd.f32 %v891, %v952
      %v969 = vadd.f32 %v894, %v967
      %970 = vst [vmem:[#allocation5 + $0x8] sm:$0xff] %v968
      %971 = vst [vmem:[#allocation5 + $0x20] sm:$0xff] %v969
      %v972 = vld [vmem:[#allocation5 + $0x10] sm:$0xff]
      %v973 = vld [vmem:[#allocation5 + $0x28] sm:$0xff]
      %v974 = vld [vmem:[#allocation4 + $0x10] sm:$0xff]
      %v975 = vld [vmem:[#allocation4 + $0x28] sm:$0xff]
      %v976 = vrcp.pop %v974
      %v977 = vmul.f32 %v974, %v976
      %v978 = vsub.f32 1.0, %v977
      %v979 = vmul.f32 %v976, %v978
      %v980 = vadd.f32 %v976, %v979
      %vm981 = vweird.f32 %v974
      %vm982 = vweird.f32 %v976
      %vm983 = vmor %vm981, %vm982
      %v984 = vsel %vm983, %v976, %v980
      %v985 = vand.u32 2147483647, %v974
      %vm986 = vcmp.eq.f32.partialorder %v985, 8.507059e+37
      %v987 = vand.u32 %v974, 2147483648
      %v988 = vor.u32 1.1754944e-38, %v987
      %v989 = vsel %vm986, %v988, %v984
      %v990 = vmul.f32 %v972, %v989
      %v991 = vrcp.pop %v975
      %v992 = vmul.f32 %v975, %v991
      %v993 = vsub.f32 1.0, %v992
      %v994 = vmul.f32 %v991, %v993
      %v995 = vadd.f32 %v991, %v994
      %vm996 = vweird.f32 %v975
      %vm997 = vweird.f32 %v991
      %vm998 = vmor %vm996, %vm997
      %v999 = vsel %vm998, %v991, %v995
      %v1000 = vand.u32 2147483647, %v975
      %vm1001 = vcmp.eq.f32.partialorder %v1000, 8.507059e+37
      %v1002 = vand.u32 %v975, 2147483648
      %v1003 = vor.u32 1.1754944e-38, %v1002
      %v1004 = vsel %vm1001, %v1003, %v999
      %v1005 = vmul.f32 %v973, %v1004
      %v1006 = vadd.f32 %v892, %v990
      %v1007 = vadd.f32 %v895, %v1005
      %1008 = vst [vmem:[#allocation5 + $0x10] sm:$0xff] %v1006
      %1009 = vst [vmem:[#allocation5 + $0x28] sm:$0xff] %v1007
      %v1010 = vld [vmem:[#allocation5] sm:$0xff]
      %v1011 = vld [vmem:[#allocation5 + $0x8] sm:$0xff]
      %v1012 = vld [vmem:[#allocation5 + $0x10] sm:$0xff]
      %v1013 = vld [vmem:[#allocation5 + $0x18] sm:$0xff]
      %v1014 = vld [vmem:[#allocation5 + $0x20] sm:$0xff]
      %v1015 = vld [vmem:[#allocation5 + $0x28] sm:$0xff]
      %v1016 = vld [vmem:[#allocation15] sm:$0xff]
      %v1017 = vld [vmem:[#allocation15 + $0x8] sm:$0xff]
      %v1018 = vld [vmem:[#allocation15 + $0x10] sm:$0xff]
      %v1019 = vld [vmem:[#allocation15 + $0x18] sm:$0xff]
      %v1020 = vld [vmem:[#allocation15 + $0x20] sm:$0xff]
      %v1021 = vld [vmem:[#allocation15 + $0x28] sm:$0xff]
      %v1022 = vld [vmem:[#allocation15 + $0x30] sm:$0xff]
      %v1023 = vld [vmem:[#allocation15 + $0x38] sm:$0xff]
      %v1024 = vld [vmem:[#allocation15 + $0x40] sm:$0xff]
      %v1025 = vld [vmem:[#allocation15 + $0x48] sm:$0xff]
      %v1026 = vld [vmem:[#allocation15 + $0x50] sm:$0xff]
      %v1027 = vld [vmem:[#allocation15 + $0x58] sm:$0xff]
      %v1028 = vld [vmem:[#allocation15 + $0x60] sm:$0xff]
      %v1029 = vld [vmem:[#allocation15 + $0x68] sm:$0xff]
      %v1030 = vld [vmem:[#allocation15 + $0x70] sm:$0xff]
      %v1031 = vld [vmem:[#allocation15 + $0x78] sm:$0xff]
      %v1032 = vld [vmem:[#allocation15 + $0x80] sm:$0xff]
      %v1033 = vld [vmem:[#allocation15 + $0x88] sm:$0xff]
      %v1034 = vld [vmem:[#allocation15 + $0x90] sm:$0xff]
      %v1035 = vld [vmem:[#allocation15 + $0x98] sm:$0xff]
      %v1036 = vld [vmem:[#allocation15 + $0xa0] sm:$0xff]
      %v1037 = vld [vmem:[#allocation15 + $0xa8] sm:$0xff]
      %v1038 = vld [vmem:[#allocation15 + $0xb0] sm:$0xff]
      %v1039 = vld [vmem:[#allocation15 + $0xb8] sm:$0xff]
      %v1040 = vld [vmem:[#allocation15 + $0xc0] sm:$0xff]
      %v1041 = vld [vmem:[#allocation15 + $0xc8] sm:$0xff]
      %v1042 = vld [vmem:[#allocation15 + $0xd0] sm:$0xff]
      %v1043 = vld [vmem:[#allocation15 + $0xd8] sm:$0xff]
      %v1044 = vld [vmem:[#allocation15 + $0xe0] sm:$0xff]
      %v1045 = vld [vmem:[#allocation15 + $0xe8] sm:$0xff]
      %v1046 = vld [vmem:[#allocation15 + $0xf0] sm:$0xff]
      %v1047 = vld [vmem:[#allocation15 + $0xf8] sm:$0xff]
      %v1048 = vld [vmem:[#allocation15 + $0x100] sm:$0xff]
      %v1049 = vld [vmem:[#allocation15 + $0x108] sm:$0xff]
      %v1050 = vld [vmem:[#allocation15 + $0x110] sm:$0xff]
      %v1051 = vld [vmem:[#allocation15 + $0x118] sm:$0xff]
      %v1052 = vld [vmem:[#allocation15 + $0x120] sm:$0xff]
      %v1053 = vld [vmem:[#allocation15 + $0x128] sm:$0xff]
      %v1054 = vld [vmem:[#allocation15 + $0x130] sm:$0xff]
      %v1055 = vld [vmem:[#allocation15 + $0x138] sm:$0xff]
      %v1056 = vld [vmem:[#allocation15 + $0x140] sm:$0xff]
      %v1057 = vld [vmem:[#allocation15 + $0x148] sm:$0xff]
      %v1058 = vld [vmem:[#allocation15 + $0x150] sm:$0xff]
      %v1059 = vld [vmem:[#allocation15 + $0x158] sm:$0xff]
      %v1060 = vld [vmem:[#allocation15 + $0x160] sm:$0xff]
      %v1061 = vld [vmem:[#allocation15 + $0x168] sm:$0xff]
      %v1062 = vld [vmem:[#allocation15 + $0x170] sm:$0xff]
      %v1063 = vld [vmem:[#allocation15 + $0x178] sm:$0xff]
      %v1064 = vld [vmem:[#allocation15 + $0x180] sm:$0xff]
      %v1065 = vld [vmem:[#allocation15 + $0x188] sm:$0xff]
      %v1066 = vld [vmem:[#allocation15 + $0x190] sm:$0xff]
      %v1067 = vld [vmem:[#allocation15 + $0x198] sm:$0xff]
      %v1068 = vld [vmem:[#allocation15 + $0x1a0] sm:$0xff]
      %v1069 = vld [vmem:[#allocation15 + $0x1a8] sm:$0xff]
      %v1070 = vld [vmem:[#allocation15 + $0x1b0] sm:$0xff]
      %v1071 = vld [vmem:[#allocation15 + $0x1b8] sm:$0xff]
      %v1072 = vld [vmem:[#allocation15 + $0x1c0] sm:$0xff]
      %v1073 = vld [vmem:[#allocation15 + $0x1c8] sm:$0xff]
      %v1074 = vld [vmem:[#allocation15 + $0x1d0] sm:$0xff]
      %v1075 = vld [vmem:[#allocation15 + $0x1d8] sm:$0xff]
      %v1076 = vld [vmem:[#allocation15 + $0x1e0] sm:$0xff]
      %v1077 = vld [vmem:[#allocation15 + $0x1e8] sm:$0xff]
      %v1078 = vld [vmem:[#allocation15 + $0x1f0] sm:$0xff]
      %v1079 = vld [vmem:[#allocation15 + $0x1f8] sm:$0xff]
      %v1080 = vld [vmem:[#allocation15 + $0x200] sm:$0xff]
      %v1081 = vld [vmem:[#allocation15 + $0x208] sm:$0xff]
      %v1082 = vld [vmem:[#allocation15 + $0x210] sm:$0xff]
      %v1083 = vld [vmem:[#allocation15 + $0x218] sm:$0xff]
      %v1084 = vld [vmem:[#allocation15 + $0x220] sm:$0xff]
      %v1085 = vld [vmem:[#allocation15 + $0x228] sm:$0xff]
      %v1086 = vld [vmem:[#allocation15 + $0x230] sm:$0xff]
      %v1087 = vld [vmem:[#allocation15 + $0x238] sm:$0xff]
      %v1088 = vld [vmem:[#allocation15 + $0x240] sm:$0xff]
      %v1089 = vld [vmem:[#allocation15 + $0x248] sm:$0xff]
      %v1090 = vld [vmem:[#allocation15 + $0x250] sm:$0xff]
      %v1091 = vld [vmem:[#allocation15 + $0x258] sm:$0xff]
      %v1092 = vld [vmem:[#allocation15 + $0x260] sm:$0xff]
      %v1093 = vld [vmem:[#allocation15 + $0x268] sm:$0xff]
      %v1094 = vld [vmem:[#allocation15 + $0x270] sm:$0xff]
      %v1095 = vld [vmem:[#allocation15 + $0x278] sm:$0xff]
      %v1096 = vld [vmem:[#allocation15 + $0x280] sm:$0xff]
      %v1097 = vld [vmem:[#allocation15 + $0x288] sm:$0xff]
      %v1098 = vld [vmem:[#allocation15 + $0x290] sm:$0xff]
      %v1099 = vld [vmem:[#allocation15 + $0x298] sm:$0xff]
      %v1100 = vld [vmem:[#allocation15 + $0x2a0] sm:$0xff]
      %v1101 = vld [vmem:[#allocation15 + $0x2a8] sm:$0xff]
      %v1102 = vld [vmem:[#allocation15 + $0x2b0] sm:$0xff]
      %v1103 = vld [vmem:[#allocation15 + $0x2b8] sm:$0xff]
      %v1104 = vld [vmem:[#allocation15 + $0x2c0] sm:$0xff]
      %v1105 = vld [vmem:[#allocation15 + $0x2c8] sm:$0xff]
      %v1106 = vld [vmem:[#allocation15 + $0x2d0] sm:$0xff]
      %v1107 = vld [vmem:[#allocation15 + $0x2d8] sm:$0xff]
      %v1108 = vld [vmem:[#allocation15 + $0x2e0] sm:$0xff]
      %v1109 = vld [vmem:[#allocation15 + $0x2e8] sm:$0xff]
      %v1110 = vld [vmem:[#allocation15 + $0x2f0] sm:$0xff]
      %v1111 = vld [vmem:[#allocation15 + $0x2f8] sm:$0xff]
      %v1112 = vld [vmem:[#allocation15 + $0x300] sm:$0xff]
      %v1113 = vld [vmem:[#allocation15 + $0x308] sm:$0xff]
      %v1114 = vld [vmem:[#allocation15 + $0x310] sm:$0xff]
      %v1115 = vld [vmem:[#allocation15 + $0x318] sm:$0xff]
      %v1116 = vld [vmem:[#allocation15 + $0x320] sm:$0xff]
      %v1117 = vld [vmem:[#allocation15 + $0x328] sm:$0xff]
      %v1118 = vld [vmem:[#allocation15 + $0x330] sm:$0xff]
      %v1119 = vld [vmem:[#allocation15 + $0x338] sm:$0xff]
      %v1120 = vld [vmem:[#allocation15 + $0x340] sm:$0xff]
      %v1121 = vld [vmem:[#allocation15 + $0x348] sm:$0xff]
      %v1122 = vld [vmem:[#allocation15 + $0x350] sm:$0xff]
      %v1123 = vld [vmem:[#allocation15 + $0x358] sm:$0xff]
      %v1124 = vld [vmem:[#allocation15 + $0x360] sm:$0xff]
      %v1125 = vld [vmem:[#allocation15 + $0x368] sm:$0xff]
      %v1126 = vld [vmem:[#allocation15 + $0x370] sm:$0xff]
      %v1127 = vld [vmem:[#allocation15 + $0x378] sm:$0xff]
      %v1128 = vld [vmem:[#allocation15 + $0x380] sm:$0xff]
      %v1129 = vld [vmem:[#allocation15 + $0x388] sm:$0xff]
      %v1130 = vld [vmem:[#allocation15 + $0x390] sm:$0xff]
      %v1131 = vld [vmem:[#allocation15 + $0x398] sm:$0xff]
      %v1132 = vld [vmem:[#allocation15 + $0x3a0] sm:$0xff]
      %v1133 = vld [vmem:[#allocation15 + $0x3a8] sm:$0xff]
      %v1134 = vld [vmem:[#allocation15 + $0x3b0] sm:$0xff]
      %v1135 = vld [vmem:[#allocation15 + $0x3b8] sm:$0xff]
      %v1136 = vld [vmem:[#allocation15 + $0x3c0] sm:$0xff]
      %v1137 = vld [vmem:[#allocation15 + $0x3c8] sm:$0xff]
      %v1138 = vld [vmem:[#allocation15 + $0x3d0] sm:$0xff]
      %v1139 = vld [vmem:[#allocation15 + $0x3d8] sm:$0xff]
      %v1140 = vld [vmem:[#allocation15 + $0x3e0] sm:$0xff]
      %v1141 = vld [vmem:[#allocation15 + $0x3e8] sm:$0xff]
      %v1142 = vld [vmem:[#allocation15 + $0x3f0] sm:$0xff]
      %v1143 = vld [vmem:[#allocation15 + $0x3f8] sm:$0xff]
      %v1144 = vld [vmem:[#allocation15 + $0x400] sm:$0xff]
      %v1145 = vld [vmem:[#allocation15 + $0x408] sm:$0xff]
      %v1146 = vld [vmem:[#allocation15 + $0x410] sm:$0xff]
      %v1147 = vld [vmem:[#allocation15 + $0x418] sm:$0xff]
      %v1148 = vld [vmem:[#allocation15 + $0x420] sm:$0xff]
      %v1149 = vld [vmem:[#allocation15 + $0x428] sm:$0xff]
      %v1150 = vld [vmem:[#allocation15 + $0x430] sm:$0xff]
      %v1151 = vld [vmem:[#allocation15 + $0x438] sm:$0xff]
      %v1152 = vld [vmem:[#allocation15 + $0x440] sm:$0xff]
      %v1153 = vld [vmem:[#allocation15 + $0x448] sm:$0xff]
      %v1154 = vld [vmem:[#allocation15 + $0x450] sm:$0xff]
      %v1155 = vld [vmem:[#allocation15 + $0x458] sm:$0xff]
      %v1156 = vld [vmem:[#allocation15 + $0x460] sm:$0xff]
      %v1157 = vld [vmem:[#allocation15 + $0x468] sm:$0xff]
      %v1158 = vld [vmem:[#allocation15 + $0x470] sm:$0xff]
      %v1159 = vld [vmem:[#allocation15 + $0x478] sm:$0xff]
      %v1160 = vld [vmem:[%s7] sm:$0x7]
      %v1162 = vperm.slane %v1160, 0
      %v1163 = vperm.slane %v1160, 1
      %v1164 = vperm.slane %v1160, 2
      %1168 = vmatpush.msra.mxu0 %v1061
      %1169 = vmatpush.msra.mxu0 %v1058
      %1170 = vmatpush.msra.mxu0 %v1055
      %1171 = vmatpush.msra.mxu0 %v1052
      %1172 = vmatpush.msra.mxu0 %v1049
      %1173 = vmatpush.msra.mxu0 %v1046
      %1174 = vmatpush.msra.mxu0 %v1043
      %1175 = vmatpush.msra.mxu0 %v1040
      %1176 = vmatpush.msra.mxu0 %v1037
      %1177 = vmatpush.msra.mxu0 %v1034
      %1178 = vmatpush.msra.mxu0 %v1031
      %1179 = vmatpush.msra.mxu0 %v1028
      %1180 = vmatpush.msra.mxu0 %v1025
      %1181 = vmatpush.msra.mxu0 %v1022
      %1182 = vmatpush.msra.mxu0 %v1019
      %1183 = vmatpush.msra.mxu0 %v1016
      %1184 = vmatmul.f32.gmra.mxu0 %v1010
      %v1185 = vpop.f32.mrf.mxu0
      %v1186 = vadd.f32 %v1162, %v1185
      %1187 = vmatmul.f32.gmra.mxu0 %v1013
      %v1188 = vpop.f32.mrf.mxu0
      %v1189 = vadd.f32 %v1162, %v1188
      %1190 = vdwg.mxu0
      %1191 = vmatpush.msra.mxu0 %v1109
      %1192 = vmatpush.msra.mxu0 %v1106
      %1193 = vmatpush.msra.mxu0 %v1103
      %1194 = vmatpush.msra.mxu0 %v1100
      %1195 = vmatpush.msra.mxu0 %v1097
      %1196 = vmatpush.msra.mxu0 %v1094
      %1197 = vmatpush.msra.mxu0 %v1091
      %1198 = vmatpush.msra.mxu0 %v1088
      %1199 = vmatpush.msra.mxu0 %v1085
      %1200 = vmatpush.msra.mxu0 %v1082
      %1201 = vmatpush.msra.mxu0 %v1079
      %1202 = vmatpush.msra.mxu0 %v1076
      %1203 = vmatpush.msra.mxu0 %v1073
      %1204 = vmatpush.msra.mxu0 %v1070
      %1205 = vmatpush.msra.mxu0 %v1067
      %1206 = vmatpush.msra.mxu0 %v1064
      %1207 = vmatmul.f32.gmra.mxu0 %v1011
      %v1208 = vpop.f32.mrf.mxu0
      %v1209 = vadd.f32 %v1186, %v1208
      %1210 = vmatmul.f32.gmra.mxu0 %v1014
      %v1211 = vpop.f32.mrf.mxu0
      %v1212 = vadd.f32 %v1189, %v1211
      %1213 = vdwg.mxu0
      %1214 = vmatpush.msra.mxu0 %v1157
      %1215 = vmatpush.msra.mxu0 %v1154
      %1216 = vmatpush.msra.mxu0 %v1151
      %1217 = vmatpush.msra.mxu0 %v1148
      %1218 = vmatpush.msra.mxu0 %v1145
      %1219 = vmatpush.msra.mxu0 %v1142
      %1220 = vmatpush.msra.mxu0 %v1139
      %1221 = vmatpush.msra.mxu0 %v1136
      %1222 = vmatpush.msra.mxu0 %v1133
      %1223 = vmatpush.msra.mxu0 %v1130
      %1224 = vmatpush.msra.mxu0 %v1127
      %1225 = vmatpush.msra.mxu0 %v1124
      %1226 = vmatpush.msra.mxu0 %v1121
      %1227 = vmatpush.msra.mxu0 %v1118
      %1228 = vmatpush.msra.mxu0 %v1115
      %1229 = vmatpush.msra.mxu0 %v1112
      %1230 = vmatmul.f32.gmra.mxu0 %v1012
      %v1231 = vpop.f32.mrf.mxu0
      %v1232 = vadd.f32 %v1209, %v1231
      %1233 = vmatmul.f32.gmra.mxu0 %v1015
      %v1234 = vpop.f32.mrf.mxu0
      %v1235 = vadd.f32 %v1212, %v1234
      %1236 = vdwg.mxu0
      %1237 = vmatpush.msra.mxu0 %v1062
      %1238 = vmatpush.msra.mxu0 %v1059
      %1239 = vmatpush.msra.mxu0 %v1056
      %1240 = vmatpush.msra.mxu0 %v1053
      %1241 = vmatpush.msra.mxu0 %v1050
      %1242 = vmatpush.msra.mxu0 %v1047
      %1243 = vmatpush.msra.mxu0 %v1044
      %1244 = vmatpush.msra.mxu0 %v1041
      %1245 = vmatpush.msra.mxu0 %v1038
      %1246 = vmatpush.msra.mxu0 %v1035
      %1247 = vmatpush.msra.mxu0 %v1032
      %1248 = vmatpush.msra.mxu0 %v1029
      %1249 = vmatpush.msra.mxu0 %v1026
      %1250 = vmatpush.msra.mxu0 %v1023
      %1251 = vmatpush.msra.mxu0 %v1020
      %1252 = vmatpush.msra.mxu0 %v1017
      %1253 = vmatmul.f32.gmra.mxu0 %v1010
      %v1254 = vpop.f32.mrf.mxu0
      %v1255 = vadd.f32 %v1163, %v1254
      %1256 = vmatmul.f32.gmra.mxu0 %v1013
      %v1257 = vpop.f32.mrf.mxu0
      %v1258 = vadd.f32 %v1163, %v1257
      %1259 = vdwg.mxu0
      %1260 = vmatpush.msra.mxu0 %v1110
      %1261 = vmatpush.msra.mxu0 %v1107
      %1262 = vmatpush.msra.mxu0 %v1104
      %1263 = vmatpush.msra.mxu0 %v1101
      %1264 = vmatpush.msra.mxu0 %v1098
      %1265 = vmatpush.msra.mxu0 %v1095
      %1266 = vmatpush.msra.mxu0 %v1092
      %1267 = vmatpush.msra.mxu0 %v1089
      %1268 = vmatpush.msra.mxu0 %v1086
      %1269 = vmatpush.msra.mxu0 %v1083
      %1270 = vmatpush.msra.mxu0 %v1080
      %1271 = vmatpush.msra.mxu0 %v1077
      %1272 = vmatpush.msra.mxu0 %v1074
      %1273 = vmatpush.msra.mxu0 %v1071
      %1274 = vmatpush.msra.mxu0 %v1068
      %1275 = vmatpush.msra.mxu0 %v1065
      %1276 = vmatmul.f32.gmra.mxu0 %v1011
      %v1277 = vpop.f32.mrf.mxu0
      %v1278 = vadd.f32 %v1255, %v1277
      %1279 = vmatmul.f32.gmra.mxu0 %v1014
      %v1280 = vpop.f32.mrf.mxu0
      %v1281 = vadd.f32 %v1258, %v1280
      %1282 = vdwg.mxu0
      %1283 = vmatpush.msra.mxu0 %v1158
      %1284 = vmatpush.msra.mxu0 %v1155
      %1285 = vmatpush.msra.mxu0 %v1152
      %1286 = vmatpush.msra.mxu0 %v1149
      %1287 = vmatpush.msra.mxu0 %v1146
      %1288 = vmatpush.msra.mxu0 %v1143
      %1289 = vmatpush.msra.mxu0 %v1140
      %1290 = vmatpush.msra.mxu0 %v1137
      %1291 = vmatpush.msra.mxu0 %v1134
      %1292 = vmatpush.msra.mxu0 %v1131
      %1293 = vmatpush.msra.mxu0 %v1128
      %1294 = vmatpush.msra.mxu0 %v1125
      %1295 = vmatpush.msra.mxu0 %v1122
      %1296 = vmatpush.msra.mxu0 %v1119
      %1297 = vmatpush.msra.mxu0 %v1116
      %1298 = vmatpush.msra.mxu0 %v1113
      %1299 = vmatmul.f32.gmra.mxu0 %v1012
      %v1300 = vpop.f32.mrf.mxu0
      %v1301 = vadd.f32 %v1278, %v1300
      %1302 = vmatmul.f32.gmra.mxu0 %v1015
      %v1303 = vpop.f32.mrf.mxu0
      %v1304 = vadd.f32 %v1281, %v1303
      %1305 = vdwg.mxu0
      %1306 = vmatpush.msra.mxu0 %v1063
      %1307 = vmatpush.msra.mxu0 %v1060
      %1308 = vmatpush.msra.mxu0 %v1057
      %1309 = vmatpush.msra.mxu0 %v1054
      %1310 = vmatpush.msra.mxu0 %v1051
      %1311 = vmatpush.msra.mxu0 %v1048
      %1312 = vmatpush.msra.mxu0 %v1045
      %1313 = vmatpush.msra.mxu0 %v1042
      %1314 = vmatpush.msra.mxu0 %v1039
      %1315 = vmatpush.msra.mxu0 %v1036
      %1316 = vmatpush.msra.mxu0 %v1033
      %1317 = vmatpush.msra.mxu0 %v1030
      %1318 = vmatpush.msra.mxu0 %v1027
      %1319 = vmatpush.msra.mxu0 %v1024
      %1320 = vmatpush.msra.mxu0 %v1021
      %1321 = vmatpush.msra.mxu0 %v1018
      %1322 = vmatmul.f32.gmra.mxu0 %v1010
      %v1323 = vpop.f32.mrf.mxu0
      %v1324 = vadd.f32 %v1164, %v1323
      %1325 = vmatmul.f32.gmra.mxu0 %v1013
      %v1326 = vpop.f32.mrf.mxu0
      %v1327 = vadd.f32 %v1164, %v1326
      %1328 = vdwg.mxu0
      %1329 = vmatpush.msra.mxu0 %v1111
      %1330 = vmatpush.msra.mxu0 %v1108
      %1331 = vmatpush.msra.mxu0 %v1105
      %1332 = vmatpush.msra.mxu0 %v1102
      %1333 = vmatpush.msra.mxu0 %v1099
      %1334 = vmatpush.msra.mxu0 %v1096
      %1335 = vmatpush.msra.mxu0 %v1093
      %1336 = vmatpush.msra.mxu0 %v1090
      %1337 = vmatpush.msra.mxu0 %v1087
      %1338 = vmatpush.msra.mxu0 %v1084
      %1339 = vmatpush.msra.mxu0 %v1081
      %1340 = vmatpush.msra.mxu0 %v1078
      %1341 = vmatpush.msra.mxu0 %v1075
      %1342 = vmatpush.msra.mxu0 %v1072
      %1343 = vmatpush.msra.mxu0 %v1069
      %1344 = vmatpush.msra.mxu0 %v1066
      %1345 = vmatmul.f32.gmra.mxu0 %v1011
      %v1346 = vpop.f32.mrf.mxu0
      %v1347 = vadd.f32 %v1324, %v1346
      %1348 = vmatmul.f32.gmra.mxu0 %v1014
      %v1349 = vpop.f32.mrf.mxu0
      %v1350 = vadd.f32 %v1327, %v1349
      %1351 = vdwg.mxu0
      %1352 = vmatpush.msra.mxu0 %v1159
      %1353 = vmatpush.msra.mxu0 %v1156
      %1354 = vmatpush.msra.mxu0 %v1153
      %1355 = vmatpush.msra.mxu0 %v1150
      %1356 = vmatpush.msra.mxu0 %v1147
      %1357 = vmatpush.msra.mxu0 %v1144
      %1358 = vmatpush.msra.mxu0 %v1141
      %1359 = vmatpush.msra.mxu0 %v1138
      %1360 = vmatpush.msra.mxu0 %v1135
      %1361 = vmatpush.msra.mxu0 %v1132
      %1362 = vmatpush.msra.mxu0 %v1129
      %1363 = vmatpush.msra.mxu0 %v1126
      %1364 = vmatpush.msra.mxu0 %v1123
      %1365 = vmatpush.msra.mxu0 %v1120
      %1366 = vmatpush.msra.mxu0 %v1117
      %1367 = vmatpush.msra.mxu0 %v1114
      %1368 = vmatmul.f32.gmra.mxu0 %v1012
      %v1369 = vpop.f32.mrf.mxu0
      %v1370 = vadd.f32 %v1347, %v1369
      %1371 = vmatmul.f32.gmra.mxu0 %v1015
      %v1372 = vpop.f32.mrf.mxu0
      %v1373 = vadd.f32 %v1350, %v1372
      %1374 = vdwg.mxu0
      %vm1375 = vcmp.ge.f32.partialorder %v1232, 0.0
      %vm1376 = vcmp.ge.f32.partialorder %v1301, 0.0
      %vm1377 = vcmp.ge.f32.partialorder %v1370, 0.0
      %vm1378 = vcmp.ge.f32.partialorder %v1235, 0.0
      %vm1379 = vcmp.ge.f32.partialorder %v1304, 0.0
      %vm1380 = vcmp.ge.f32.partialorder %v1373, 0.0
      %v1381 = vmul.f32 %v1232, 0.2
      %v1382 = vmul.f32 %v1301, 0.2
      %v1383 = vmul.f32 %v1370, 0.2
      %v1384 = vmul.f32 %v1235, 0.2
      %v1385 = vmul.f32 %v1304, 0.2
      %v1386 = vmul.f32 %v1373, 0.2
      %v1387 = vsel %vm1375, %v1232, %v1381
      %v1388 = vsel %vm1376, %v1301, %v1382
      %v1389 = vsel %vm1377, %v1370, %v1383
      %v1390 = vsel %vm1378, %v1235, %v1384
      %v1391 = vsel %vm1379, %v1304, %v1385
      %v1392 = vsel %vm1380, %v1373, %v1386
      %v1393 = vadd.f32 %v890, %v1387
      %v1394 = vadd.f32 %v891, %v1388
      %v1395 = vadd.f32 %v892, %v1389
      %v1396 = vadd.f32 %v893, %v1390
      %v1397 = vadd.f32 %v894, %v1391
      %v1398 = vadd.f32 %v895, %v1392
      %1399 = vst [vmem:[#allocation17] sm:$0xff] %v1393
      %1400 = vst [vmem:[#allocation17 + $0x8] sm:$0xff] %v1394
      %1401 = vst [vmem:[#allocation17 + $0x10] sm:$0xff] %v1395
      %1402 = vst [vmem:[#allocation17 + $0x18] sm:$0xff] %v1396
      %1403 = vst [vmem:[#allocation17 + $0x20] sm:$0xff] %v1397
      %1404 = vst [vmem:[#allocation17 + $0x28] sm:$0xff] %v1398
    $region65: #{tpu_custom_call.1} parent=1 // pred_fallthru
      _
    // Predicated region
    $region66: #{tpu_custom_call.1} parent=1 // pred_check
      _
    $region67: #{tpu_custom_call.1} parent=1 // pred_check_branch
      %1406 = sbr.rel (0) target = $region69
    $region68: #{tpu_custom_call.1} parent=1 // pred_region
      %1408 = vsyncadd [#allocation8], 0
      %s1409 = sshll.u32 [#allocation17], 4
      %s1410 = int_to_ptr.vmem [resolvable:$true] %s1409
      %s1411 = sshll.u32 %s8, 4
      %s1412 = int_to_ptr.hbm [resolvable:$true] %s1411
      %1417 = dma.vmem_to_hbm [thread:$0]  %s1410, 768, %s1412, [#allocation8], 384, 384, 24
    $region69: #{tpu_custom_call.1} parent=1 // pred_fallthru
      _
    // Predicated region
    $region70: #{tpu_custom_call.1} parent=1 // pred_check
      _
    $region71: #{tpu_custom_call.1} parent=1 // pred_check_branch
      %1419 = sbr.rel (0) target = $region73
    $region72: #{tpu_custom_call.1} parent=1 // pred_region
      %1421 = dma.done [#allocation8], 768
    $region73: #{tpu_custom_call.1} parent=1 // pred_fallthru
      _
    %1422 = vsyncpa [#allocation7], 1
    %1423 = vsyncpa [#allocation10], 1
    %1424 = vsyncpa [#allocation13], 1
    %1425 = vsyncpa [#allocation16], 1
    %1426 = vsyncpa [#allocation8], 1

</llo_original>
